<compile_context>
chip_gen: v7x
topology: tpu7x:2x2x1
jax: 0.10.0
libtpu: 0.0.40
codegen_flags: <defaults>
</compile_context>

<pallas_src>
import numpy as np
import jax
import jax.numpy as jnp
from jax.experimental import pallas as pl
from jax.experimental.pallas import tpu as pltpu

LRELU_SLOPE = 0.2
IN_EPS = 1e-5


def _gsynth_kernel(
    xu_ref,     # (1, Cin, N)     nearest-upsampled input, batch tile packed on lanes (N = Bt*2L)
    w0_ref,     # (Cout, 3*Cin)   conv0 im2col weights (wscale applied), tap-major columns
    w1_ref,     # (Cout, 3*Cout)  conv1 im2col weights
    cvec_ref,   # (Cout, 4)       columns: [b0, nw1, b1, nw2]
    st_ref,     # (1, 4*Cout, Bt) rows: [s1_scale(+1); s1_shift; s2_scale(+1); s2_shift]
    n1_ref,     # (1, 1, N)       noise for epi1 (packed like xu)
    n2_ref,     # (1, 1, N)       noise for epi2
    mask_ref,   # (2, N)          row0: x[j-1] exists within the sample; row1: x[j+1] exists
    segm_ref,   # (N, Bt)         per-sample mean reducer: indicator / L2
    segt_ref,   # (Bt, N)         per-sample broadcaster: indicator
    out_ref,    # (1, Cout, N)
):
    f32 = jnp.float32
    Cout = out_ref.shape[1]
    N = out_ref.shape[-1]

    mask_prev = mask_ref[0:1, :]            # (1, N)
    mask_next = mask_ref[1:2, :]            # (1, N)
    segm = segm_ref[...]                    # (N, Bt)
    segt = segt_ref[...]                    # (Bt, N)

    def shift_prev(v):
        # result[:, j] = v[:, j-1], zero at each per-sample start (XLU roll + VPU mul)
        return pltpu.roll(v, shift=1, axis=1) * mask_prev

    def shift_next(v):
        # result[:, j] = v[:, j+1], zero at each per-sample end
        return pltpu.roll(v, shift=N - 1, axis=1) * mask_next

    def conv3(v, w):
        # im2col: stack the 3 taps on sublanes, then ONE (Cout, 3C) @ (3C, N) matmul.
        col = jnp.concatenate([shift_prev(v), v, shift_next(v)], axis=0)
        return jnp.dot(w, col, preferred_element_type=f32)

    consts = cvec_ref[...]                  # (Cout, 4)
    b0 = consts[:, 0:1]
    nw1 = consts[:, 1:2]
    b1 = consts[:, 2:3]
    nw2 = consts[:, 3:4]

    st = st_ref[0]                          # (4*Cout, Bt)
    s1_scale = st[0:Cout]
    s1_shift = st[Cout:2 * Cout]
    s2_scale = st[2 * Cout:3 * Cout]
    s2_shift = st[3 * Cout:4 * Cout]

    def epilogue(y, nw, noise_row, s_scale, s_shift):
        # noise: per-channel weight * per-position noise
        y = y + nw * noise_row                                        # (Cout,1)*(1,N)
        # LeakyReLU(0.2)
        y = jnp.where(y >= 0.0, y, LRELU_SLOPE * y)
        # InstanceNorm1d (no affine, biased variance, eps=1e-5), per sample, one pass:
        # segmented lane reductions on the (otherwise idle) MXU.
        mean_b = jnp.dot(y, segm, preferred_element_type=f32)         # (Cout, Bt)
        msq_b = jnp.dot(y * y, segm, preferred_element_type=f32)      # (Cout, Bt)
        rstd_b = jax.lax.rsqrt(msq_b - mean_b * mean_b + IN_EPS)
        # fold InstanceNorm + style modulation: out = y*a + c, per sample/channel
        a_b = rstd_b * s_scale                                        # (Cout, Bt)
        c_b = s_shift - mean_b * a_b                                  # (Cout, Bt)
        return (y * jnp.dot(a_b, segt, preferred_element_type=f32)
                + jnp.dot(c_b, segt, preferred_element_type=f32))

    x = xu_ref[0].astype(f32)               # (Cin, N)
    n1 = n1_ref[0].astype(f32)              # (1, N)
    n2 = n2_ref[0].astype(f32)

    # conv0_up (2x nearest upsample applied in wrapper): conv -> blur [1,2,1]/4 -> +bias
    y = conv3(x, w0_ref[...])
    y = 0.25 * shift_prev(y) + 0.5 * y + 0.25 * shift_next(y)
    y = y + b0
    y = epilogue(y, nw1, n1, s1_scale, s1_shift)

    # conv1: conv -> +bias
    y = conv3(y, w1_ref[...])
    y = y + b1
    y = epilogue(y, nw2, n2, s2_scale, s2_shift)

    out_ref[0] = y


def _auto_batch_tile(B, Cin, Cout, L2, vmem_budget_bytes=40 << 20):
    """Pick a batch tile Bt (divisor of B) such that:
       - the grid keeps >= 2 steps when B >= 2 (megacore sharding on v7x,
         prefetch/compute overlap everywhere),
       - the (double-buffered) per-step working set stays under a v7x-safe
         VMEM budget,
       - lane width Bt*L2 is preferably a multiple of 128 (unmasked stores)."""
    best, best_key = 1, (-1, -1)
    for t in range(1, B + 1):
        if B % t:
            continue
        if B >= 2 and (B // t) < 2:
            continue
        n = t * L2
        streamed = (Cin + Cout + 2) * n + 4 * Cout * t          # per-step tiles (f32 words)
        invariant = Cout * (3 * Cin + 3 * Cout + 4) + 2 * n + 2 * n * t
        if (2 * streamed + 2 * invariant) * 4 > vmem_budget_bytes:
            continue
        key = (1 if n % 128 == 0 else 0, n)
        if key > best_key:
            best, best_key = t, key
    return best


def gsynthesis_block(x, dlatents, noise1, noise2, p, batch_tile=None,
                     stream_dtype=jnp.float32, vmem_limit_bytes=48 << 20):
    """x: (B, Cin, L) NCL; dlatents: (B, 2, W); noise*: (B, 2L). Returns (B, Cout, 2L) NCL."""
    B, Cin, L = x.shape
    Cout = p["b0"].shape[0]
    L2 = 2 * L
    f32 = jnp.float32

    Bt = batch_tile if batch_tile is not None else _auto_batch_tile(B, Cin, Cout, L2)
    assert B % Bt == 0, "batch_tile must divide the batch size"
    N = Bt * L2
    G = B // Bt

    # nearest-neighbor 2x upsample (pure data replication; kept in the wrapper)
    xu = jnp.repeat(x.astype(f32), 2, axis=2)                          # (B, Cin, 2L)
    # pack the batch tile onto the lane axis: (G, Cin, Bt*2L)
    xu = xu.reshape(G, Bt, Cin, L2).transpose(0, 2, 1, 3).reshape(G, Cin, N)
    xu = xu.astype(stream_dtype)

    # conv taps im2col in the wrapper: (Cout, Cin, 3) -> (Cout, 3*Cin), tap-major columns
    w0c = jnp.transpose(p["w0"].astype(f32), (0, 2, 1)).reshape(Cout, 3 * Cin)
    w1c = jnp.transpose(p["w1"].astype(f32), (0, 2, 1)).reshape(Cout, 3 * Cout)

    # per-channel constants packed: [b0, nw1, b1, nw2]
    cvec = jnp.stack([p["b0"], p["nw1"], p["b1"], p["nw2"]], axis=1).astype(f32)  # (Cout, 4)

    # style affine hoisted out of the kernel: one batched XLA matmul per epilogue
    style1 = dlatents[:, 0].astype(f32) @ p["sw1"].astype(f32).T + p["sb1"].astype(f32)
    style2 = dlatents[:, 1].astype(f32) @ p["sw2"].astype(f32).T + p["sb2"].astype(f32)
    st = jnp.concatenate(
        [style1[:, :Cout] + 1.0, style1[:, Cout:],
         style2[:, :Cout] + 1.0, style2[:, Cout:]], axis=1)            # (B, 4*Cout)
    st = st.reshape(G, Bt, 4 * Cout).transpose(0, 2, 1)                # (G, 4*Cout, Bt)

    # noise packed like xu: (G, 1, N)
    n1 = noise1.astype(stream_dtype).reshape(G, 1, N)
    n2 = noise2.astype(stream_dtype).reshape(G, 1, N)

    # host-built constants: per-sample boundary masks + segment reducer/broadcaster
    pos = np.arange(N) % L2
    masks = jnp.asarray(np.stack([(pos >= 1), (pos <= L2 - 2)]).astype(np.float32))  # (2, N)
    ind = ((np.arange(N) // L2)[:, None] == np.arange(Bt)[None, :]).astype(np.float32)
    segm = jnp.asarray(ind / L2)                                       # (N, Bt)
    segt = jnp.asarray(ind.T)                                          # (Bt, N)

    out = pl.pallas_call(
        _gsynth_kernel,
        out_shape=jax.ShapeDtypeStruct((G, Cout, N), f32),
        grid=(G,),
        in_specs=[
            pl.BlockSpec((1, Cin, N), lambda i: (i, 0, 0)),            # xu (streamed)
            pl.BlockSpec((Cout, 3 * Cin), lambda i: (0, 0)),           # w0c (grid-invariant)
            pl.BlockSpec((Cout, 3 * Cout), lambda i: (0, 0)),          # w1c
            pl.BlockSpec((Cout, 4), lambda i: (0, 0)),                 # cvec
            pl.BlockSpec((1, 4 * Cout, Bt), lambda i: (i, 0, 0)),      # styles (per tile)
            pl.BlockSpec((1, 1, N), lambda i: (i, 0, 0)),              # noise1
            pl.BlockSpec((1, 1, N), lambda i: (i, 0, 0)),              # noise2
            pl.BlockSpec((2, N), lambda i: (0, 0)),                    # boundary masks
            pl.BlockSpec((N, Bt), lambda i: (0, 0)),                   # segment mean reducer
            pl.BlockSpec((Bt, N), lambda i: (0, 0)),                   # segment broadcaster
        ],
        out_specs=pl.BlockSpec((1, Cout, N), lambda i: (i, 0, 0)),
        compiler_params=pltpu.CompilerParams(
            dimension_semantics=("parallel",),
            vmem_limit_bytes=vmem_limit_bytes),
    )(xu, w0c, w1c, cvec, st, n1, n2, masks, segm, segt)

    # unpack lanes back to (B, Cout, 2L) NCL
    out = out.reshape(G, Cout, Bt, L2).transpose(0, 2, 1, 3).reshape(B, Cout, L2)
    return out


# ------------------------- plain-JAX reference ------------------------------
def reference_forward(x, dlatents, noise1, noise2, p):
    def conv1d(xx, w):
        return jax.lax.conv_general_dilated(
            xx, w, window_strides=(1,), padding=[(1, 1)],
            dimension_numbers=("NCH", "OIH", "NCH"))

    Cout = p["b0"].shape[0]
    xu = jnp.repeat(x, 2, axis=2)
    y = conv1d(xu, p["w0"])
    bk = jnp.tile(jnp.array([0.25, 0.5, 0.25], jnp.float32)[None, None, :], (Cout, 1, 1))
    y = jax.lax.conv_general_dilated(
        y, bk, (1,), [(1, 1)], dimension_numbers=("NCH", "OIH", "NCH"),
        feature_group_count=Cout)
    y = y + p["b0"][None, :, None]

    def epi(y, nw, n, sw, sb, dl):
        y = y + nw[None, :, None] * n[:, None, :]
        y = jnp.where(y >= 0, y, LRELU_SLOPE * y)
        mean = jnp.mean(y, axis=2, keepdims=True)
        var = jnp.mean((y - mean) ** 2, axis=2, keepdims=True)
        y = (y - mean) * jax.lax.rsqrt(var + IN_EPS)
        style = dl @ sw.T + sb
        return y * (style[:, :Cout][:, :, None] + 1.0) + style[:, Cout:][:, :, None]

    y = epi(y, p["nw1"], noise1, p["sw1"], p["sb1"], dlatents[:, 0])
    y = conv1d(y, p["w1"]) + p["b1"][None, :, None]
    y = epi(y, p["nw2"], noise2, p["sw2"], p["sb2"], dlatents[:, 1])
    return y


if __name__ == "__main__":
    key = jax.random.PRNGKey(0)
    # B=8 so the auto-tiler picks Bt=4 (lane width 4*32=128, grid of 2 steps).
    B, Cin, Cout, L, W = 8, 8, 8, 16, 32
    L2 = 2 * L
    ks = jax.random.split(key, 16)

    gain = 2.0 ** 0.5
    he0 = gain * (Cin * 3) ** -0.5          # conv0_up wscale multiplier
    he1 = gain * (Cout * 3) ** -0.5         # conv1 wscale multiplier
    hes = 1.0 * W ** -0.5                   # style linear (gain=1.0) wscale multiplier

    params = dict(
        w0=jax.random.normal(ks[0], (Cout, Cin, 3), jnp.float32) * he0,
        b0=jax.random.normal(ks[1], (Cout,), jnp.float32) * 0.1,
        nw1=jax.random.normal(ks[2], (Cout,), jnp.float32) * 0.1,
        sw1=jax.random.normal(ks[3], (2 * Cout, W), jnp.float32) * hes,
        sb1=jax.random.normal(ks[4], (2 * Cout,), jnp.float32) * 0.1,
        w1=jax.random.normal(ks[5], (Cout, Cout, 3), jnp.float32) * he1,
        b1=jax.random.normal(ks[6], (Cout,), jnp.float32) * 0.1,
        nw2=jax.random.normal(ks[7], (Cout,), jnp.float32) * 0.1,
        sw2=jax.random.normal(ks[8], (2 * Cout, W), jnp.float32) * hes,
        sb2=jax.random.normal(ks[9], (2 * Cout,), jnp.float32) * 0.1,
    )
    x = jax.random.normal(ks[10], (B, Cin, L), jnp.float32)
    dlatents = jax.random.normal(ks[11], (B, 2, W), jnp.float32)
    noise1 = jax.random.normal(ks[12], (B, L2), jnp.float32)
    noise2 = jax.random.normal(ks[13], (B, L2), jnp.float32)

    out = jax.block_until_ready(gsynthesis_block(x, dlatents, noise1, noise2, params))
    assert out.shape == (B, Cout, L2), out.shape

    ref = reference_forward(x, dlatents, noise1, noise2, params)
    # Tolerance documented: MXU matmuls at default precision + one-pass
    # (E[y^2]-mean^2) InstanceNorm moments vs. the exact-f32 two-pass reference.
    np.testing.assert_allclose(np.asarray(out), np.asarray(ref), rtol=2e-3, atol=2e-3)

    print("KERNEL_OK")
</pallas_src>

<mosaic_0001>
module attributes {stable_mosaic.version = 11 : i64} {
  func.func @_gsynth_kernel(%arg0: i32, %arg1: memref<1x8x128xf32, #tpu.memory_space<vmem>>, %arg2: memref<8x24xf32, #tpu.memory_space<vmem>>, %arg3: memref<8x24xf32, #tpu.memory_space<vmem>>, %arg4: memref<8x4xf32, #tpu.memory_space<vmem>>, %arg5: memref<1x32x4xf32, #tpu.memory_space<vmem>>, %arg6: memref<1x1x128xf32, #tpu.memory_space<vmem>>, %arg7: memref<1x1x128xf32, #tpu.memory_space<vmem>>, %arg8: memref<2x128xf32, #tpu.memory_space<vmem>>, %arg9: memref<128x4xf32, #tpu.memory_space<vmem>>, %arg10: memref<4x128xf32, #tpu.memory_space<vmem>>, %arg11: memref<1x8x128xf32, #tpu.memory_space<vmem>>) attributes {dimension_semantics = [#tpu.dimension_semantics<parallel>], iteration_bounds = array<i64: 2>, scalar_prefetch = 0 : i64, scratch_operands = 0 : i64, tpu.core_type = #tpu.core_type<tc>, window_params = [{transform_indices = @transform_0, window_bounds = array<i64: 1, 8, 128>}, {pipeline_mode = #tpu.pipeline_mode<synchronous>, transform_indices = @transform_1, window_bounds = array<i64: 8, 24>}, {pipeline_mode = #tpu.pipeline_mode<synchronous>, transform_indices = @transform_2, window_bounds = array<i64: 8, 24>}, {pipeline_mode = #tpu.pipeline_mode<synchronous>, transform_indices = @transform_3, window_bounds = array<i64: 8, 4>}, {transform_indices = @transform_4, window_bounds = array<i64: 1, 32, 4>}, {transform_indices = @transform_5, window_bounds = array<i64: 1, 1, 128>}, {transform_indices = @transform_6, window_bounds = array<i64: 1, 1, 128>}, {pipeline_mode = #tpu.pipeline_mode<synchronous>, transform_indices = @transform_7, window_bounds = array<i64: 2, 128>}, {pipeline_mode = #tpu.pipeline_mode<synchronous>, transform_indices = @transform_8, window_bounds = array<i64: 128, 4>}, {pipeline_mode = #tpu.pipeline_mode<synchronous>, transform_indices = @transform_9, window_bounds = array<i64: 4, 128>}, {transform_indices = @transform_10, window_bounds = array<i64: 1, 8, 128>}]} {
    %c0 = arith.constant 0 : index
    %c0_0 = arith.constant 0 : index
    %0 = vector.load %arg8[%c0, %c0_0] : memref<2x128xf32, #tpu.memory_space<vmem>>, vector<1x128xf32>
    %c1 = arith.constant 1 : index
    %c0_1 = arith.constant 0 : index
    %1 = vector.load %arg8[%c1, %c0_1] : memref<2x128xf32, #tpu.memory_space<vmem>>, vector<1x128xf32>
    %c0_2 = arith.constant 0 : index
    %c0_3 = arith.constant 0 : index
    %2 = vector.load %arg9[%c0_2, %c0_3] : memref<128x4xf32, #tpu.memory_space<vmem>>, vector<128x4xf32>
    %c0_4 = arith.constant 0 : index
    %c0_5 = arith.constant 0 : index
    %3 = vector.load %arg10[%c0_4, %c0_5] : memref<4x128xf32, #tpu.memory_space<vmem>>, vector<4x128xf32>
    %c0_6 = arith.constant 0 : index
    %c0_7 = arith.constant 0 : index
    %4 = vector.load %arg4[%c0_6, %c0_7] : memref<8x4xf32, #tpu.memory_space<vmem>>, vector<8x4xf32>
    %5 = vector.extract_strided_slice %4 {offsets = [0, 0], sizes = [8, 1], strides = [1, 1]} : vector<8x4xf32> to vector<8x1xf32>
    %6 = vector.extract_strided_slice %4 {offsets = [0, 1], sizes = [8, 1], strides = [1, 1]} : vector<8x4xf32> to vector<8x1xf32>
    %7 = vector.extract_strided_slice %4 {offsets = [0, 2], sizes = [8, 1], strides = [1, 1]} : vector<8x4xf32> to vector<8x1xf32>
    %8 = vector.extract_strided_slice %4 {offsets = [0, 3], sizes = [8, 1], strides = [1, 1]} : vector<8x4xf32> to vector<8x1xf32>
    %c0_8 = arith.constant 0 : index
    %c0_9 = arith.constant 0 : index
    %c0_10 = arith.constant 0 : index
    %9 = vector.load %arg5[%c0_8, %c0_9, %c0_10] : memref<1x32x4xf32, #tpu.memory_space<vmem>>, vector<1x32x4xf32>
    %10 = vector.shape_cast %9 : vector<1x32x4xf32> to vector<32x4xf32>
    %11 = vector.extract_strided_slice %10 {offsets = [0, 0], sizes = [8, 4], strides = [1, 1]} : vector<32x4xf32> to vector<8x4xf32>
    %12 = vector.extract_strided_slice %10 {offsets = [8, 0], sizes = [8, 4], strides = [1, 1]} : vector<32x4xf32> to vector<8x4xf32>
    %13 = vector.extract_strided_slice %10 {offsets = [16, 0], sizes = [8, 4], strides = [1, 1]} : vector<32x4xf32> to vector<8x4xf32>
    %14 = vector.extract_strided_slice %10 {offsets = [24, 0], sizes = [8, 4], strides = [1, 1]} : vector<32x4xf32> to vector<8x4xf32>
    %c0_11 = arith.constant 0 : index
    %c0_12 = arith.constant 0 : index
    %c0_13 = arith.constant 0 : index
    %15 = vector.load %arg1[%c0_11, %c0_12, %c0_13] : memref<1x8x128xf32, #tpu.memory_space<vmem>>, vector<1x8x128xf32>
    %16 = vector.shape_cast %15 : vector<1x8x128xf32> to vector<8x128xf32>
    %c0_14 = arith.constant 0 : index
    %c0_15 = arith.constant 0 : index
    %c0_16 = arith.constant 0 : index
    %17 = vector.load %arg6[%c0_14, %c0_15, %c0_16] : memref<1x1x128xf32, #tpu.memory_space<vmem>>, vector<1x1x128xf32>
    %18 = vector.shape_cast %17 : vector<1x1x128xf32> to vector<1x128xf32>
    %c0_17 = arith.constant 0 : index
    %c0_18 = arith.constant 0 : index
    %c0_19 = arith.constant 0 : index
    %19 = vector.load %arg7[%c0_17, %c0_18, %c0_19] : memref<1x1x128xf32, #tpu.memory_space<vmem>>, vector<1x1x128xf32>
    %20 = vector.shape_cast %19 : vector<1x1x128xf32> to vector<1x128xf32>
    %c0_20 = arith.constant 0 : index
    %c0_21 = arith.constant 0 : index
    %21 = vector.load %arg2[%c0_20, %c0_21] : memref<8x24xf32, #tpu.memory_space<vmem>>, vector<8x24xf32>
    %c1_i32 = arith.constant 1 : i32
    %22 = tpu.dynamic_rotate %16 by %c1_i32 dim 1 : vector<8x128xf32>, i32 -> vector<8x128xf32>
    %23 = vector.broadcast %0 : vector<1x128xf32> to vector<8x128xf32>
    %24 = arith.mulf %22, %23 : vector<8x128xf32>
    %c127_i32 = arith.constant 127 : i32
    %25 = tpu.dynamic_rotate %16 by %c127_i32 dim 1 : vector<8x128xf32>, i32 -> vector<8x128xf32>
    %26 = vector.broadcast %1 : vector<1x128xf32> to vector<8x128xf32>
    %27 = arith.mulf %25, %26 : vector<8x128xf32>
    %28 = tpu.concatenate %24, %16, %27 in 0 : vector<8x128xf32>, vector<8x128xf32>, vector<8x128xf32> -> vector<24x128xf32>
    %cst = arith.constant dense<0.000000e+00> : vector<8x128xf32>
    %29 = tpu.matmul %21, %28, %cst {dimension_numbers = #tpu.dot_dimension_numbers<[1], [0], [0], [1], [0, 0, 1, 1], [], []>} : vector<8x24xf32>, vector<24x128xf32>, vector<8x128xf32> -> vector<8x128xf32>
    %c1_i32_22 = arith.constant 1 : i32
    %30 = tpu.dynamic_rotate %29 by %c1_i32_22 dim 1 : vector<8x128xf32>, i32 -> vector<8x128xf32>
    %31 = vector.broadcast %0 : vector<1x128xf32> to vector<8x128xf32>
    %32 = arith.mulf %30, %31 : vector<8x128xf32>
    %cst_23 = arith.constant 2.500000e-01 : f32
    %33 = vector.broadcast %cst_23 : f32 to vector<8x128xf32>
    %34 = arith.mulf %33, %32 : vector<8x128xf32>
    %cst_24 = arith.constant 5.000000e-01 : f32
    %35 = vector.broadcast %cst_24 : f32 to vector<8x128xf32>
    %36 = arith.mulf %35, %29 : vector<8x128xf32>
    %37 = arith.addf %34, %36 : vector<8x128xf32>
    %c127_i32_25 = arith.constant 127 : i32
    %38 = tpu.dynamic_rotate %29 by %c127_i32_25 dim 1 : vector<8x128xf32>, i32 -> vector<8x128xf32>
    %39 = vector.broadcast %1 : vector<1x128xf32> to vector<8x128xf32>
    %40 = arith.mulf %38, %39 : vector<8x128xf32>
    %cst_26 = arith.constant 2.500000e-01 : f32
    %41 = vector.broadcast %cst_26 : f32 to vector<8x128xf32>
    %42 = arith.mulf %41, %40 : vector<8x128xf32>
    %43 = arith.addf %37, %42 : vector<8x128xf32>
    %44 = vector.broadcast %5 : vector<8x1xf32> to vector<8x128xf32>
    %45 = arith.addf %43, %44 : vector<8x128xf32>
    %46 = vector.broadcast %6 : vector<8x1xf32> to vector<8x128xf32>
    %47 = vector.broadcast %18 : vector<1x128xf32> to vector<8x128xf32>
    %48 = arith.mulf %46, %47 : vector<8x128xf32>
    %49 = arith.addf %45, %48 : vector<8x128xf32>
    %cst_27 = arith.constant 0.000000e+00 : f32
    %50 = vector.broadcast %cst_27 : f32 to vector<8x128xf32>
    %51 = arith.cmpf oge, %49, %50 : vector<8x128xf32>
    %cst_28 = arith.constant 2.000000e-01 : f32
    %52 = vector.broadcast %cst_28 : f32 to vector<8x128xf32>
    %53 = arith.mulf %52, %49 : vector<8x128xf32>
    %54 = arith.select %51, %49, %53 : vector<8x128xi1>, vector<8x128xf32>
    %cst_29 = arith.constant dense<0.000000e+00> : vector<8x4xf32>
    %55 = tpu.matmul %54, %2, %cst_29 {dimension_numbers = #tpu.dot_dimension_numbers<[1], [0], [0], [1], [0, 0, 1, 1], [], []>} : vector<8x128xf32>, vector<128x4xf32>, vector<8x4xf32> -> vector<8x4xf32>
    %56 = arith.mulf %54, %54 : vector<8x128xf32>
    %cst_30 = arith.constant dense<0.000000e+00> : vector<8x4xf32>
    %57 = tpu.matmul %56, %2, %cst_30 {dimension_numbers = #tpu.dot_dimension_numbers<[1], [0], [0], [1], [0, 0, 1, 1], [], []>} : vector<8x128xf32>, vector<128x4xf32>, vector<8x4xf32> -> vector<8x4xf32>
    %58 = arith.mulf %55, %55 : vector<8x4xf32>
    %59 = arith.subf %57, %58 : vector<8x4xf32>
    %cst_31 = arith.constant 9.99999974E-6 : f32
    %60 = vector.broadcast %cst_31 : f32 to vector<8x4xf32>
    %61 = arith.addf %59, %60 : vector<8x4xf32>
    %62 = math.rsqrt %61 : vector<8x4xf32>
    %63 = arith.mulf %62, %11 : vector<8x4xf32>
    %64 = arith.mulf %55, %63 : vector<8x4xf32>
    %65 = arith.subf %12, %64 : vector<8x4xf32>
    %cst_32 = arith.constant dense<0.000000e+00> : vector<8x128xf32>
    %66 = tpu.matmul %63, %3, %cst_32 {dimension_numbers = #tpu.dot_dimension_numbers<[1], [0], [0], [1], [0, 0, 1, 1], [], []>} : vector<8x4xf32>, vector<4x128xf32>, vector<8x128xf32> -> vector<8x128xf32>
    %67 = arith.mulf %54, %66 : vector<8x128xf32>
    %cst_33 = arith.constant dense<0.000000e+00> : vector<8x128xf32>
    %68 = tpu.matmul %65, %3, %cst_33 {dimension_numbers = #tpu.dot_dimension_numbers<[1], [0], [0], [1], [0, 0, 1, 1], [], []>} : vector<8x4xf32>, vector<4x128xf32>, vector<8x128xf32> -> vector<8x128xf32>
    %69 = arith.addf %67, %68 : vector<8x128xf32>
    %c0_34 = arith.constant 0 : index
    %c0_35 = arith.constant 0 : index
    %70 = vector.load %arg3[%c0_34, %c0_35] : memref<8x24xf32, #tpu.memory_space<vmem>>, vector<8x24xf32>
    %c1_i32_36 = arith.constant 1 : i32
    %71 = tpu.dynamic_rotate %69 by %c1_i32_36 dim 1 : vector<8x128xf32>, i32 -> vector<8x128xf32>
    %72 = vector.broadcast %0 : vector<1x128xf32> to vector<8x128xf32>
    %73 = arith.mulf %71, %72 : vector<8x128xf32>
    %c127_i32_37 = arith.constant 127 : i32
    %74 = tpu.dynamic_rotate %69 by %c127_i32_37 dim 1 : vector<8x128xf32>, i32 -> vector<8x128xf32>
    %75 = vector.broadcast %1 : vector<1x128xf32> to vector<8x128xf32>
    %76 = arith.mulf %74, %75 : vector<8x128xf32>
    %77 = tpu.concatenate %73, %69, %76 in 0 : vector<8x128xf32>, vector<8x128xf32>, vector<8x128xf32> -> vector<24x128xf32>
    %cst_38 = arith.constant dense<0.000000e+00> : vector<8x128xf32>
    %78 = tpu.matmul %70, %77, %cst_38 {dimension_numbers = #tpu.dot_dimension_numbers<[1], [0], [0], [1], [0, 0, 1, 1], [], []>} : vector<8x24xf32>, vector<24x128xf32>, vector<8x128xf32> -> vector<8x128xf32>
    %79 = vector.broadcast %7 : vector<8x1xf32> to vector<8x128xf32>
    %80 = arith.addf %78, %79 : vector<8x128xf32>
    %81 = vector.broadcast %8 : vector<8x1xf32> to vector<8x128xf32>
    %82 = vector.broadcast %20 : vector<1x128xf32> to vector<8x128xf32>
    %83 = arith.mulf %81, %82 : vector<8x128xf32>
    %84 = arith.addf %80, %83 : vector<8x128xf32>
    %cst_39 = arith.constant 0.000000e+00 : f32
    %85 = vector.broadcast %cst_39 : f32 to vector<8x128xf32>
    %86 = arith.cmpf oge, %84, %85 : vector<8x128xf32>
    %cst_40 = arith.constant 2.000000e-01 : f32
    %87 = vector.broadcast %cst_40 : f32 to vector<8x128xf32>
    %88 = arith.mulf %87, %84 : vector<8x128xf32>
    %89 = arith.select %86, %84, %88 : vector<8x128xi1>, vector<8x128xf32>
    %cst_41 = arith.constant dense<0.000000e+00> : vector<8x4xf32>
    %90 = tpu.matmul %89, %2, %cst_41 {dimension_numbers = #tpu.dot_dimension_numbers<[1], [0], [0], [1], [0, 0, 1, 1], [], []>} : vector<8x128xf32>, vector<128x4xf32>, vector<8x4xf32> -> vector<8x4xf32>
    %91 = arith.mulf %89, %89 : vector<8x128xf32>
    %cst_42 = arith.constant dense<0.000000e+00> : vector<8x4xf32>
    %92 = tpu.matmul %91, %2, %cst_42 {dimension_numbers = #tpu.dot_dimension_numbers<[1], [0], [0], [1], [0, 0, 1, 1], [], []>} : vector<8x128xf32>, vector<128x4xf32>, vector<8x4xf32> -> vector<8x4xf32>
    %93 = arith.mulf %90, %90 : vector<8x4xf32>
    %94 = arith.subf %92, %93 : vector<8x4xf32>
    %cst_43 = arith.constant 9.99999974E-6 : f32
    %95 = vector.broadcast %cst_43 : f32 to vector<8x4xf32>
    %96 = arith.addf %94, %95 : vector<8x4xf32>
    %97 = math.rsqrt %96 : vector<8x4xf32>
    %98 = arith.mulf %97, %13 : vector<8x4xf32>
    %99 = arith.mulf %90, %98 : vector<8x4xf32>
    %100 = arith.subf %14, %99 : vector<8x4xf32>
    %cst_44 = arith.constant dense<0.000000e+00> : vector<8x128xf32>
    %101 = tpu.matmul %98, %3, %cst_44 {dimension_numbers = #tpu.dot_dimension_numbers<[1], [0], [0], [1], [0, 0, 1, 1], [], []>} : vector<8x4xf32>, vector<4x128xf32>, vector<8x128xf32> -> vector<8x128xf32>
    %102 = arith.mulf %89, %101 : vector<8x128xf32>
    %cst_45 = arith.constant dense<0.000000e+00> : vector<8x128xf32>
    %103 = tpu.matmul %100, %3, %cst_45 {dimension_numbers = #tpu.dot_dimension_numbers<[1], [0], [0], [1], [0, 0, 1, 1], [], []>} : vector<8x4xf32>, vector<4x128xf32>, vector<8x128xf32> -> vector<8x128xf32>
    %104 = arith.addf %102, %103 : vector<8x128xf32>
    %c0_46 = arith.constant 0 : index
    %c0_47 = arith.constant 0 : index
    %c0_48 = arith.constant 0 : index
    %105 = vector.load %arg11[%c0_46, %c0_47, %c0_48] : memref<1x8x128xf32, #tpu.memory_space<vmem>>, vector<1x8x128xf32>
    %106 = vector.shape_cast %105 : vector<1x8x128xf32> to vector<8x128xf32>
    %107 = vector.shape_cast %104 : vector<8x128xf32> to vector<1x8x128xf32>
    tpu.vector_store %arg11[%c0_46, %c0_47, %c0_48], %107 {strides = array<i32>} : memref<1x8x128xf32, #tpu.memory_space<vmem>>, vector<1x8x128xf32>,
    return
  }
  func.func @transform_0(%arg0: i32) -> (i32, i32, i32) {
    %c0_i32 = arith.constant 0 : i32
    %c0_i32_0 = arith.constant 0 : i32
    %c0_i32_1 = arith.constant 0 : i32
    return %arg0, %c0_i32, %c0_i32_0 : i32, i32, i32
  }
  func.func @transform_1(%arg0: i32) -> (i32, i32) {
    %c0_i32 = arith.constant 0 : i32
    %c0_i32_0 = arith.constant 0 : i32
    %c0_i32_1 = arith.constant 0 : i32
    return %c0_i32, %c0_i32_0 : i32, i32
  }
  func.func @transform_2(%arg0: i32) -> (i32, i32) {
    %c0_i32 = arith.constant 0 : i32
    %c0_i32_0 = arith.constant 0 : i32
    %c0_i32_1 = arith.constant 0 : i32
    return %c0_i32, %c0_i32_0 : i32, i32
  }
  func.func @transform_3(%arg0: i32) -> (i32, i32) {
    %c0_i32 = arith.constant 0 : i32
    %c0_i32_0 = arith.constant 0 : i32
    %c0_i32_1 = arith.constant 0 : i32
    return %c0_i32, %c0_i32_0 : i32, i32
  }
  func.func @transform_4(%arg0: i32) -> (i32, i32, i32) {
    %c0_i32 = arith.constant 0 : i32
    %c0_i32_0 = arith.constant 0 : i32
    %c0_i32_1 = arith.constant 0 : i32
    return %arg0, %c0_i32, %c0_i32_0 : i32, i32, i32
  }
  func.func @transform_5(%arg0: i32) -> (i32, i32, i32) {
    %c0_i32 = arith.constant 0 : i32
    %c0_i32_0 = arith.constant 0 : i32
    %c0_i32_1 = arith.constant 0 : i32
    return %arg0, %c0_i32, %c0_i32_0 : i32, i32, i32
  }
  func.func @transform_6(%arg0: i32) -> (i32, i32, i32) {
    %c0_i32 = arith.constant 0 : i32
    %c0_i32_0 = arith.constant 0 : i32
    %c0_i32_1 = arith.constant 0 : i32
    return %arg0, %c0_i32, %c0_i32_0 : i32, i32, i32
  }
  func.func @transform_7(%arg0: i32) -> (i32, i32) {
    %c0_i32 = arith.constant 0 : i32
    %c0_i32_0 = arith.constant 0 : i32
    %c0_i32_1 = arith.constant 0 : i32
    return %c0_i32, %c0_i32_0 : i32, i32
  }
  func.func @transform_8(%arg0: i32) -> (i32, i32) {
    %c0_i32 = arith.constant 0 : i32
    %c0_i32_0 = arith.constant 0 : i32
    %c0_i32_1 = arith.constant 0 : i32
    return %c0_i32, %c0_i32_0 : i32, i32
  }
  func.func @transform_9(%arg0: i32) -> (i32, i32) {
    %c0_i32 = arith.constant 0 : i32
    %c0_i32_0 = arith.constant 0 : i32
    %c0_i32_1 = arith.constant 0 : i32
    return %c0_i32, %c0_i32_0 : i32, i32
  }
  func.func @transform_10(%arg0: i32) -> (i32, i32, i32) {
    %c0_i32 = arith.constant 0 : i32
    %c0_i32_0 = arith.constant 0 : i32
    %c0_i32_1 = arith.constant 0 : i32
    return %arg0, %c0_i32, %c0_i32_0 : i32, i32, i32
  }
}

</mosaic_0001>

<llo_original>
// kernel: tpu_custom_call.1
$region0: #{tpu_custom_call.1}
  #allocation0 [shape = 'u32[]', space=smem, size = 0x4, offset = 0x4, fixed_abs, tag = 'smem constant byte address 0x4 - core index']
  #allocation1 [shape = 'u32[144,128]{1,0:T(1,128)}', space=vmem, size = 0x12000, scoped, tag = 'internal scratch']
  %s0 = inlined_call_operand.vmem [shape: f32[2,8,128], index: 0, kind: input, shape index: {}]
  %s1 = inlined_call_operand.vmem [shape: f32[8,24], index: 1, kind: input, shape index: {}]
  %s2 = inlined_call_operand.vmem [shape: f32[8,24], index: 2, kind: input, shape index: {}]
  %s3 = inlined_call_operand.vmem [shape: f32[8,4], index: 3, kind: input, shape index: {}]
  %s4 = inlined_call_operand.vmem [shape: f32[2,32,4], index: 4, kind: input, shape index: {}]
  %s5 = inlined_call_operand.vmem [shape: f32[2,1,128], index: 5, kind: input, shape index: {}]
  %s6 = inlined_call_operand.vmem [shape: f32[2,1,128], index: 6, kind: input, shape index: {}]
  %s7 = inlined_call_operand.vmem [shape: f32[2,128], index: 7, kind: input, shape index: {}]
  %s8 = inlined_call_operand.vmem [shape: f32[128,4], index: 8, kind: input, shape index: {}]
  %s9 = inlined_call_operand.vmem [shape: f32[4,128], index: 9, kind: input, shape index: {}]
  %s10 = inlined_call_operand.hbm [shape: f32[2,8,128], index: 10, kind: output, shape index: {}]
  %s11 = sld [smem:[#allocation0]]
  $region73: #{tpu_custom_call.1} parent=0
    _
  %s13 = ssub.s32 1, %s11
  %s14 = scalar_select 0, %s13, %s11
  $region1: #{tpu_custom_call.1} parent=0
    #allocation2 [shape = 'u8[8192]{0}', space=vmem, size = 0x2000, scoped, tag = 'output window, operand 0']
    #allocation3 [shape = 's32[2]{0}', space=sflag, size = 0x8, scoped, tag = 'scoped memory for tpu_custom_call.1']
    %15 = vsyncpa [#allocation3], 0
    %s16 = scalar_lea.sflag [#allocation3], 1
    %17 = vsyncpa %s16, 0
    loop: start=0, step=1, limit=4
    $region2: #{tpu_custom_call.1} parent=1 // loop_pre_header
      _
    $region3: #{tpu_custom_call.1} parent=1 // loop_header
      %s19 = sphi 0, %s23
      %p20 = scmp.ge.s32.totalorder %s19, 4
      %s29 = sphi 0, %s31
      %s32 = sphi 0, %s29
      %s33 = sphi 0, %s32
      %s49 = sphi 0, %s33
      %s53 = sphi 0, %s53
      %s55 = sphi 0, %s53
      %s56 = sphi 0, %s55
      %s70 = sphi 0, %s56
      %s74 = sphi 0, %s74
      %s76 = sphi 0, %s74
      %s77 = sphi 0, %s76
      %s91 = sphi 0, %s77
      %s95 = sphi 0, %s95
      %s97 = sphi 0, %s95
      %s98 = sphi 0, %s97
      %s112 = sphi 0, %s98
      %s118 = sphi 0, %s120
      %s121 = sphi 0, %s118
      %s122 = sphi 0, %s121
      %s138 = sphi 0, %s122
      %s144 = sphi 0, %s146
      %s147 = sphi 0, %s144
      %s148 = sphi 0, %s147
      %s164 = sphi 0, %s148
      %s170 = sphi 0, %s172
      %s173 = sphi 0, %s170
      %s174 = sphi 0, %s173
      %s190 = sphi 0, %s174
      %s194 = sphi 0, %s194
      %s196 = sphi 0, %s194
      %s197 = sphi 0, %s196
      %s211 = sphi 0, %s197
      %s215 = sphi 0, %s215
      %s217 = sphi 0, %s215
      %s218 = sphi 0, %s217
      %s232 = sphi 0, %s218
      %s236 = sphi 0, %s236
      %s238 = sphi 0, %s236
      %s239 = sphi 0, %s238
      %s253 = sphi 0, %s239
      %s259 = sphi 0, %s261
      %s262 = sphi 0, %s259
      %s263 = sphi 0, %s262
      %s279 = sphi 0, %s263
    $region4: #{tpu_custom_call.1} parent=1 // loop_header_branch
      %22 = sbr.rel (%p20) target = $region8
    $region5: #{tpu_custom_call.1} parent=1 // loop_body
      %s24 = ssub.s32 %s19, 1
      %s25 = ssub.s32 %s19, 2
      %s26 = sadd.s32 %s19, 1
      %s27 = ssub.s32 %s19, %s26
      %p28 = scmp.eq.s32.totalorder %s27, 0
      %s30 = sadd.s32 %s29, 1
      %s31 = scalar_select %p28, %s29, %s30
      %p34 = pneg %p28
      %p35 = scmp.eq.s32.totalorder %s19, 1
      %p36 = por %p34, %p35
      %p37 = scmp.ne.s32.totalorder %s29, %s32
      %p38 = scmp.eq.s32.totalorder %s19, 0
      %p39 = por %p37, %p38
      %p40 = scmp.ne.s32.totalorder %s29, %s32
      %p41 = scmp.eq.s32.totalorder %s24, 1
      %p42 = por %p40, %p41
      %p43 = scmp.ne.s32.totalorder %s32, %s33
      %p44 = scmp.eq.s32.totalorder %s24, 0
      %p45 = por %p43, %p44
      %p46 = scmp.ne.s32.totalorder %s32, %s33
      %p47 = scmp.eq.s32.totalorder %s25, 1
      %p48 = por %p46, %p47
      %p50 = scmp.ne.s32.totalorder %s33, %s49
      %p51 = scmp.eq.s32.totalorder %s25, 0
      %p52 = por %p50, %p51
      %s54 = sadd.s32 %s53, 1
      %p57 = scmp.eq.s32.totalorder %s19, 1
      %p58 = scmp.ne.s32.totalorder %s53, %s55
      %p59 = scmp.eq.s32.totalorder %s19, 0
      %p60 = por %p58, %p59
      %p61 = scmp.ne.s32.totalorder %s53, %s55
      %p62 = scmp.eq.s32.totalorder %s24, 1
      %p63 = por %p61, %p62
      %p64 = scmp.ne.s32.totalorder %s55, %s56
      %p65 = scmp.eq.s32.totalorder %s24, 0
      %p66 = por %p64, %p65
      %p67 = scmp.ne.s32.totalorder %s55, %s56
      %p68 = scmp.eq.s32.totalorder %s25, 1
      %p69 = por %p67, %p68
      %p71 = scmp.ne.s32.totalorder %s56, %s70
      %p72 = scmp.eq.s32.totalorder %s25, 0
      %p73 = por %p71, %p72
      %s75 = sadd.s32 %s74, 1
      %p78 = scmp.eq.s32.totalorder %s19, 1
      %p79 = scmp.ne.s32.totalorder %s74, %s76
      %p80 = scmp.eq.s32.totalorder %s19, 0
      %p81 = por %p79, %p80
      %p82 = scmp.ne.s32.totalorder %s74, %s76
      %p83 = scmp.eq.s32.totalorder %s24, 1
      %p84 = por %p82, %p83
      %p85 = scmp.ne.s32.totalorder %s76, %s77
      %p86 = scmp.eq.s32.totalorder %s24, 0
      %p87 = por %p85, %p86
      %p88 = scmp.ne.s32.totalorder %s76, %s77
      %p89 = scmp.eq.s32.totalorder %s25, 1
      %p90 = por %p88, %p89
      %p92 = scmp.ne.s32.totalorder %s77, %s91
      %p93 = scmp.eq.s32.totalorder %s25, 0
      %p94 = por %p92, %p93
      %s96 = sadd.s32 %s95, 1
      %p99 = scmp.eq.s32.totalorder %s19, 1
      %p100 = scmp.ne.s32.totalorder %s95, %s97
      %p101 = scmp.eq.s32.totalorder %s19, 0
      %p102 = por %p100, %p101
      %p103 = scmp.ne.s32.totalorder %s95, %s97
      %p104 = scmp.eq.s32.totalorder %s24, 1
      %p105 = por %p103, %p104
      %p106 = scmp.ne.s32.totalorder %s97, %s98
      %p107 = scmp.eq.s32.totalorder %s24, 0
      %p108 = por %p106, %p107
      %p109 = scmp.ne.s32.totalorder %s97, %s98
      %p110 = scmp.eq.s32.totalorder %s25, 1
      %p111 = por %p109, %p110
      %p113 = scmp.ne.s32.totalorder %s98, %s112
      %p114 = scmp.eq.s32.totalorder %s25, 0
      %p115 = por %p113, %p114
      %s116 = ssub.s32 %s19, %s26
      %p117 = scmp.eq.s32.totalorder %s116, 0
      %s119 = sadd.s32 %s118, 1
      %s120 = scalar_select %p117, %s118, %s119
      %p123 = pneg %p117
      %p124 = scmp.eq.s32.totalorder %s19, 1
      %p125 = por %p123, %p124
      %p126 = scmp.ne.s32.totalorder %s118, %s121
      %p127 = scmp.eq.s32.totalorder %s19, 0
      %p128 = por %p126, %p127
      %p129 = scmp.ne.s32.totalorder %s118, %s121
      %p130 = scmp.eq.s32.totalorder %s24, 1
      %p131 = por %p129, %p130
      %p132 = scmp.ne.s32.totalorder %s121, %s122
      %p133 = scmp.eq.s32.totalorder %s24, 0
      %p134 = por %p132, %p133
      %p135 = scmp.ne.s32.totalorder %s121, %s122
      %p136 = scmp.eq.s32.totalorder %s25, 1
      %p137 = por %p135, %p136
      %p139 = scmp.ne.s32.totalorder %s122, %s138
      %p140 = scmp.eq.s32.totalorder %s25, 0
      %p141 = por %p139, %p140
      %s142 = ssub.s32 %s19, %s26
      %p143 = scmp.eq.s32.totalorder %s142, 0
      %s145 = sadd.s32 %s144, 1
      %s146 = scalar_select %p143, %s144, %s145
      %p149 = pneg %p143
      %p150 = scmp.eq.s32.totalorder %s19, 1
      %p151 = por %p149, %p150
      %p152 = scmp.ne.s32.totalorder %s144, %s147
      %p153 = scmp.eq.s32.totalorder %s19, 0
      %p154 = por %p152, %p153
      %p155 = scmp.ne.s32.totalorder %s144, %s147
      %p156 = scmp.eq.s32.totalorder %s24, 1
      %p157 = por %p155, %p156
      %p158 = scmp.ne.s32.totalorder %s147, %s148
      %p159 = scmp.eq.s32.totalorder %s24, 0
      %p160 = por %p158, %p159
      %p161 = scmp.ne.s32.totalorder %s147, %s148
      %p162 = scmp.eq.s32.totalorder %s25, 1
      %p163 = por %p161, %p162
      %p165 = scmp.ne.s32.totalorder %s148, %s164
      %p166 = scmp.eq.s32.totalorder %s25, 0
      %p167 = por %p165, %p166
      %s168 = ssub.s32 %s19, %s26
      %p169 = scmp.eq.s32.totalorder %s168, 0
      %s171 = sadd.s32 %s170, 1
      %s172 = scalar_select %p169, %s170, %s171
      %p175 = pneg %p169
      %p176 = scmp.eq.s32.totalorder %s19, 1
      %p177 = por %p175, %p176
      %p178 = scmp.ne.s32.totalorder %s170, %s173
      %p179 = scmp.eq.s32.totalorder %s19, 0
      %p180 = por %p178, %p179
      %p181 = scmp.ne.s32.totalorder %s170, %s173
      %p182 = scmp.eq.s32.totalorder %s24, 1
      %p183 = por %p181, %p182
      %p184 = scmp.ne.s32.totalorder %s173, %s174
      %p185 = scmp.eq.s32.totalorder %s24, 0
      %p186 = por %p184, %p185
      %p187 = scmp.ne.s32.totalorder %s173, %s174
      %p188 = scmp.eq.s32.totalorder %s25, 1
      %p189 = por %p187, %p188
      %p191 = scmp.ne.s32.totalorder %s174, %s190
      %p192 = scmp.eq.s32.totalorder %s25, 0
      %p193 = por %p191, %p192
      %s195 = sadd.s32 %s194, 1
      %p198 = scmp.eq.s32.totalorder %s19, 1
      %p199 = scmp.ne.s32.totalorder %s194, %s196
      %p200 = scmp.eq.s32.totalorder %s19, 0
      %p201 = por %p199, %p200
      %p202 = scmp.ne.s32.totalorder %s194, %s196
      %p203 = scmp.eq.s32.totalorder %s24, 1
      %p204 = por %p202, %p203
      %p205 = scmp.ne.s32.totalorder %s196, %s197
      %p206 = scmp.eq.s32.totalorder %s24, 0
      %p207 = por %p205, %p206
      %p208 = scmp.ne.s32.totalorder %s196, %s197
      %p209 = scmp.eq.s32.totalorder %s25, 1
      %p210 = por %p208, %p209
      %p212 = scmp.ne.s32.totalorder %s197, %s211
      %p213 = scmp.eq.s32.totalorder %s25, 0
      %p214 = por %p212, %p213
      %s216 = sadd.s32 %s215, 1
      %p219 = scmp.eq.s32.totalorder %s19, 1
      %p220 = scmp.ne.s32.totalorder %s215, %s217
      %p221 = scmp.eq.s32.totalorder %s19, 0
      %p222 = por %p220, %p221
      %p223 = scmp.ne.s32.totalorder %s215, %s217
      %p224 = scmp.eq.s32.totalorder %s24, 1
      %p225 = por %p223, %p224
      %p226 = scmp.ne.s32.totalorder %s217, %s218
      %p227 = scmp.eq.s32.totalorder %s24, 0
      %p228 = por %p226, %p227
      %p229 = scmp.ne.s32.totalorder %s217, %s218
      %p230 = scmp.eq.s32.totalorder %s25, 1
      %p231 = por %p229, %p230
      %p233 = scmp.ne.s32.totalorder %s218, %s232
      %p234 = scmp.eq.s32.totalorder %s25, 0
      %p235 = por %p233, %p234
      %s237 = sadd.s32 %s236, 1
      %p240 = scmp.eq.s32.totalorder %s19, 1
      %p241 = scmp.ne.s32.totalorder %s236, %s238
      %p242 = scmp.eq.s32.totalorder %s19, 0
      %p243 = por %p241, %p242
      %p244 = scmp.ne.s32.totalorder %s236, %s238
      %p245 = scmp.eq.s32.totalorder %s24, 1
      %p246 = por %p244, %p245
      %p247 = scmp.ne.s32.totalorder %s238, %s239
      %p248 = scmp.eq.s32.totalorder %s24, 0
      %p249 = por %p247, %p248
      %p250 = scmp.ne.s32.totalorder %s238, %s239
      %p251 = scmp.eq.s32.totalorder %s25, 1
      %p252 = por %p250, %p251
      %p254 = scmp.ne.s32.totalorder %s239, %s253
      %p255 = scmp.eq.s32.totalorder %s25, 0
      %p256 = por %p254, %p255
      %s257 = ssub.s32 %s19, %s26
      %p258 = scmp.eq.s32.totalorder %s257, 0
      %s260 = sadd.s32 %s259, 1
      %s261 = scalar_select %p258, %s259, %s260
      %p264 = pneg %p258
      %p265 = scmp.eq.s32.totalorder %s19, 1
      %p266 = por %p264, %p265
      %p267 = scmp.ne.s32.totalorder %s259, %s262
      %p268 = scmp.eq.s32.totalorder %s19, 0
      %p269 = por %p267, %p268
      %p270 = scmp.ne.s32.totalorder %s259, %s262
      %p271 = scmp.eq.s32.totalorder %s24, 1
      %p272 = por %p270, %p271
      %p273 = scmp.ne.s32.totalorder %s262, %s263
      %p274 = scmp.eq.s32.totalorder %s24, 0
      %p275 = por %p273, %p274
      %p276 = scmp.ne.s32.totalorder %s262, %s263
      %p277 = scmp.eq.s32.totalorder %s25, 1
      %p278 = por %p276, %p277
      %p280 = scmp.ne.s32.totalorder %s263, %s279
      %p281 = scmp.eq.s32.totalorder %s25, 0
      %p282 = por %p280, %p281
      %p283 = scmp.le.s32.totalorder 1, %s19
      %p284 = scmp.lt.s32.totalorder %s19, 3
      %p285 = pnand %p283, %p284
      %p286 = pneg %p285
      // Predicated region
      $region9: #{tpu_custom_call.1} parent=5 // pred_check
        _
      $region10: #{tpu_custom_call.1} parent=5 // pred_check_branch
        %288 = sbr.rel (%p285) target = $region12
      $region11: #{tpu_custom_call.1} parent=5 // pred_region
        %s289 = ssub.s32 %s19, 1
        // Predicated region
        $region13: #{tpu_custom_call.1} parent=11 // pred_check
          %p290 = pneg %p66
        $region14: #{tpu_custom_call.1} parent=11 // pred_check_branch
          %292 = sbr.rel (%p290) target = $region16
        $region15: #{tpu_custom_call.1} parent=11 // pred_region
          _
        $region16: #{tpu_custom_call.1} parent=11 // pred_fallthru
          _
        // Predicated region
        $region17: #{tpu_custom_call.1} parent=11 // pred_check
          %p293 = pneg %p87
        $region18: #{tpu_custom_call.1} parent=11 // pred_check_branch
          %295 = sbr.rel (%p293) target = $region20
        $region19: #{tpu_custom_call.1} parent=11 // pred_region
          _
        $region20: #{tpu_custom_call.1} parent=11 // pred_fallthru
          _
        // Predicated region
        $region21: #{tpu_custom_call.1} parent=11 // pred_check
          %p296 = pneg %p108
        $region22: #{tpu_custom_call.1} parent=11 // pred_check_branch
          %298 = sbr.rel (%p296) target = $region24
        $region23: #{tpu_custom_call.1} parent=11 // pred_region
          _
        $region24: #{tpu_custom_call.1} parent=11 // pred_fallthru
          _
        // Predicated region
        $region25: #{tpu_custom_call.1} parent=11 // pred_check
          %p299 = pneg %p207
        $region26: #{tpu_custom_call.1} parent=11 // pred_check_branch
          %301 = sbr.rel (%p299) target = $region28
        $region27: #{tpu_custom_call.1} parent=11 // pred_region
          _
        $region28: #{tpu_custom_call.1} parent=11 // pred_fallthru
          _
        // Predicated region
        $region29: #{tpu_custom_call.1} parent=11 // pred_check
          %p302 = pneg %p228
        $region30: #{tpu_custom_call.1} parent=11 // pred_check_branch
          %304 = sbr.rel (%p302) target = $region32
        $region31: #{tpu_custom_call.1} parent=11 // pred_region
          _
        $region32: #{tpu_custom_call.1} parent=11 // pred_fallthru
          _
        // Predicated region
        $region33: #{tpu_custom_call.1} parent=11 // pred_check
          %p305 = pneg %p249
        $region34: #{tpu_custom_call.1} parent=11 // pred_check_branch
          %307 = sbr.rel (%p305) target = $region36
        $region35: #{tpu_custom_call.1} parent=11 // pred_region
          _
        $region36: #{tpu_custom_call.1} parent=11 // pred_fallthru
          _
      $region12: #{tpu_custom_call.1} parent=5 // pred_fallthru
        _
      %p308 = scmp.lt.s32.totalorder %s19, 2
      // Predicated region
      $region37: #{tpu_custom_call.1} parent=5 // pred_check
        %p309 = pneg %p308
      $region38: #{tpu_custom_call.1} parent=5 // pred_check_branch
        %311 = sbr.rel (%p309) target = $region40
      $region39: #{tpu_custom_call.1} parent=5 // pred_region
        // Predicated region
        $region41: #{tpu_custom_call.1} parent=39 // pred_check
          %p312 = pneg %p39
        $region42: #{tpu_custom_call.1} parent=39 // pred_check_branch
          %314 = sbr.rel (%p312) target = $region44
        $region43: #{tpu_custom_call.1} parent=39 // pred_region
          %p315 = scmp.lt.s32.totalorder %s19, 1
          %s316 = scalar_select %p315, %s19, 1
          %s317 = smul.addr %s316, 8
          %s318 = scalar_lea.vmem %s0, %s317
        $region44: #{tpu_custom_call.1} parent=39 // pred_fallthru
          _
        // Predicated region
        $region45: #{tpu_custom_call.1} parent=39 // pred_check
          %p319 = pneg %p128
        $region46: #{tpu_custom_call.1} parent=39 // pred_check_branch
          %321 = sbr.rel (%p319) target = $region48
        $region47: #{tpu_custom_call.1} parent=39 // pred_region
          %p322 = scmp.lt.s32.totalorder %s19, 1
          %s323 = scalar_select %p322, %s19, 1
          %s324 = smul.addr %s323, 4
          %s325 = smul.addr %s324, 8
          %s326 = scalar_lea.vmem %s4, %s325
        $region48: #{tpu_custom_call.1} parent=39 // pred_fallthru
          _
        // Predicated region
        $region49: #{tpu_custom_call.1} parent=39 // pred_check
          %p327 = pneg %p154
        $region50: #{tpu_custom_call.1} parent=39 // pred_check_branch
          %329 = sbr.rel (%p327) target = $region52
        $region51: #{tpu_custom_call.1} parent=39 // pred_region
          %p330 = scmp.lt.s32.totalorder %s19, 1
          %s331 = scalar_select %p330, %s19, 1
          %s332 = scalar_lea.vmem %s5, %s331
        $region52: #{tpu_custom_call.1} parent=39 // pred_fallthru
          _
        // Predicated region
        $region53: #{tpu_custom_call.1} parent=39 // pred_check
          %p333 = pneg %p180
        $region54: #{tpu_custom_call.1} parent=39 // pred_check_branch
          %335 = sbr.rel (%p333) target = $region56
        $region55: #{tpu_custom_call.1} parent=39 // pred_region
          %p336 = scmp.lt.s32.totalorder %s19, 1
          %s337 = scalar_select %p336, %s19, 1
          %s338 = scalar_lea.vmem %s6, %s337
        $region56: #{tpu_custom_call.1} parent=39 // pred_fallthru
          _
      $region40: #{tpu_custom_call.1} parent=5 // pred_fallthru
        _
      %p339 = scmp.le.s32.totalorder 1, %s19
      %p340 = scmp.lt.s32.totalorder %s19, 3
      %p341 = pnand %p339, %p340
      %p342 = pneg %p341
      // Predicated region
      $region57: #{tpu_custom_call.1} parent=5 // pred_check
        _
      $region58: #{tpu_custom_call.1} parent=5 // pred_check_branch
        %344 = sbr.rel (%p341) target = $region60
      $region59: #{tpu_custom_call.1} parent=5 // pred_region
        %s345 = ssub.s32 %s19, 1
        %p346 = scmp.lt.s32.totalorder %s24, 1
        %s347 = scalar_select %p346, %s24, 1
        %s348 = smul.addr %s347, 8
        %s349 = scalar_lea.vmem %s0, %s348
        %p350 = pneg %p45
        %p351 = pneg %p42
        %p352 = pneg %p66
        %p353 = pneg %p63
        %p354 = pneg %p87
        %p355 = pneg %p84
        %p356 = pneg %p108
        %p357 = pneg %p105
        %p358 = scmp.lt.s32.totalorder %s24, 1
        %s359 = scalar_select %p358, %s24, 1
        %s360 = smul.addr %s359, 4
        %s361 = smul.addr %s360, 8
        %s362 = scalar_lea.vmem %s4, %s361
        %p363 = pneg %p134
        %p364 = pneg %p131
        %p365 = scmp.lt.s32.totalorder %s24, 1
        %s366 = scalar_select %p365, %s24, 1
        %s367 = scalar_lea.vmem %s5, %s366
        %p368 = pneg %p160
        %p369 = pneg %p157
        %p370 = scmp.lt.s32.totalorder %s24, 1
        %s371 = scalar_select %p370, %s24, 1
        %s372 = scalar_lea.vmem %s6, %s371
        %p373 = pneg %p186
        %p374 = pneg %p183
        %p375 = pneg %p207
        %p376 = pneg %p204
        %p377 = pneg %p228
        %p378 = pneg %p225
        %p379 = pneg %p249
        %p380 = pneg %p246
        %p381 = pneg %p275
        %p382 = pneg %p272
        %s383 = sand.u32 %s262, 1
        %s384 = scalar_lea.sflag [#allocation3], %s383
        %s385 = sand.u32 %s262, 1
        %s386 = smul.addr %s385, 8
        %s387 = scalar_lea.vmem [#allocation2], %s386
        %p388 = scmp.lt.s32.totalorder %s24, 1
        %s389 = scalar_select %p388, %s24, 1
        %s390 = smul.addr %s389, 8
        %s391 = scalar_lea.vmem %s0, %s390
        %p392 = scmp.lt.s32.totalorder %s24, 1
        %s393 = scalar_select %p392, %s24, 1
        %s394 = smul.addr %s393, 4
        %s395 = smul.addr %s394, 8
        %s396 = scalar_lea.vmem %s4, %s395
        %p397 = scmp.lt.s32.totalorder %s24, 1
        %s398 = scalar_select %p397, %s24, 1
        %s399 = scalar_lea.vmem %s5, %s398
        %p400 = scmp.lt.s32.totalorder %s24, 1
        %s401 = scalar_select %p400, %s24, 1
        %s402 = scalar_lea.vmem %s6, %s401
        %v403 = vld [vmem:[%s7] sm:$0x1]
        %v404 = vld [vmem:[%s7 + $0x1] sm:$0x1]
        %v405 = vld [vmem:[%s8] sm:$0xff]
        %v406 = vld [vmem:[%s8 + $0x8] sm:$0xff]
        %v407 = vld [vmem:[%s8 + $0x10] sm:$0xff]
        %v408 = vld [vmem:[%s8 + $0x18] sm:$0xff]
        %v409 = vld [vmem:[%s8 + $0x20] sm:$0xff]
        %v410 = vld [vmem:[%s8 + $0x28] sm:$0xff]
        %v411 = vld [vmem:[%s8 + $0x30] sm:$0xff]
        %v412 = vld [vmem:[%s8 + $0x38] sm:$0xff]
        %v413 = vld [vmem:[%s8 + $0x40] sm:$0xff]
        %v414 = vld [vmem:[%s8 + $0x48] sm:$0xff]
        %v415 = vld [vmem:[%s8 + $0x50] sm:$0xff]
        %v416 = vld [vmem:[%s8 + $0x58] sm:$0xff]
        %v417 = vld [vmem:[%s8 + $0x60] sm:$0xff]
        %v418 = vld [vmem:[%s8 + $0x68] sm:$0xff]
        %v419 = vld [vmem:[%s8 + $0x70] sm:$0xff]
        %v420 = vld [vmem:[%s8 + $0x78] sm:$0xff]
        %v421 = vld [vmem:[%s9] sm:$0xf]
        %v422 = vld [vmem:[%s3] sm:$0xff]
        %v423 = vld [vmem:[%s396] sm:$0xff]
        %v424 = vld [vmem:[%s396 + $0x8] sm:$0xff]
        %v425 = vld [vmem:[%s396 + $0x10] sm:$0xff]
        %v426 = vld [vmem:[%s396 + $0x18] sm:$0xff]
        %v427 = vld [vmem:[%s391] sm:$0xff]
        %v428 = vld [vmem:[%s399] sm:$0x1]
        %v429 = vld [vmem:[%s402] sm:$0x1]
        %v430 = vld [vmem:[%s1] sm:$0xff]
        %431 = vrot.lane.b32.xlu0 %v427, 1
        %v432 = vpop.permute.xlu0 %431
        %v433 = vlaneseq
        %v434 = vshrl.u32 %v433, 7
        %v435 = vsub.s32 0, %v434
        %v436 = vrot.slane %v403, %v435
        %v437 = vmul.f32 %v432, %v436
        %438 = vrot.lane.b32.xlu0 %v427, 127
        %v439 = vpop.permute.xlu0 %438
        %v440 = vlaneseq
        %v441 = vshrl.u32 %v440, 7
        %v442 = vsub.s32 0, %v441
        %v443 = vrot.slane %v404, %v442
        %v444 = vmul.f32 %v439, %v443
        %vm445 = vcmask 195584
        %v447 = vsel %vm445, %v430, 0
        %449 = vmatprep.subr.mxu0 0.0
        %450 = vmatpush1.msra.mxu0 %v437
        %451 = vmatprep.subr.mxu0 0.0
        %452 = vmatpush1.msra.mxu0 %v427
        %453 = vmatprep.subr.mxu0 0.0
        %454 = vmatpush1.msra.mxu0 %v444
        %455 = vmatprep.subr.mxu0 0.0
        %456 = vmatpush1.msra.mxu0 0.0
        %457 = vmatprep.subr.mxu0 0.0
        %458 = vmatpush1.msra.mxu0 0.0
        %459 = vmatprep.subr.mxu0 0.0
        %460 = vmatpush1.msra.mxu0 0.0
        %461 = vmatprep.subr.mxu0 0.0
        %462 = vmatpush1.msra.mxu0 0.0
        %463 = vmatprep.subr.mxu0 0.0
        %464 = vmatpush1.msra.mxu0 0.0
        %465 = vmatprep.subr.mxu0 0.0
        %466 = vmatpush1.msra.mxu0 0.0
        %467 = vmatprep.subr.mxu0 0.0
        %468 = vmatpush1.msra.mxu0 0.0
        %469 = vmatprep.subr.mxu0 0.0
        %470 = vmatpush1.msra.mxu0 0.0
        %471 = vmatprep.subr.mxu0 0.0
        %472 = vmatpush1.msra.mxu0 0.0
        %473 = vmatprep.subr.mxu0 0.0
        %474 = vmatpush1.msra.mxu0 0.0
        %475 = vmatprep.subr.mxu0 0.0
        %476 = vmatpush1.msra.mxu0 0.0
        %477 = vmatprep.subr.mxu0 0.0
        %478 = vmatpush1.msra.mxu0 0.0
        %479 = vmatprep.subr.mxu0 0.0
        %480 = vmatpush1.msra.mxu0 0.0
        %481 = vmatprep.subr.mxu0 0.0
        %482 = vmatpush1.msra.mxu0 0.0
        %483 = vmatprep.subr.mxu0 0.0
        %484 = vmatpush1.msra.mxu0 0.0
        %485 = vmatprep.subr.mxu0 0.0
        %486 = vmatpush1.msra.mxu0 0.0
        %487 = vmatprep.subr.mxu0 0.0
        %488 = vmatpush1.msra.mxu0 0.0
        %489 = vmatprep.subr.mxu0 0.0
        %490 = vmatpush1.msra.mxu0 0.0
        %491 = vmatprep.subr.mxu0 0.0
        %492 = vmatpush1.msra.mxu0 0.0
        %493 = vmatprep.subr.mxu0 0.0
        %494 = vmatpush1.msra.mxu0 0.0
        %495 = vmatprep.subr.mxu0 0.0
        %496 = vmatpush1.msra.mxu0 0.0
        %497 = vmatprep.subr.mxu0 0.0
        %498 = vmatpush1.msra.mxu0 0.0
        %499 = vmatprep.subr.mxu0 0.0
        %500 = vmatpush1.msra.mxu0 0.0
        %501 = vmatprep.subr.mxu0 0.0
        %502 = vmatpush1.msra.mxu0 0.0
        %503 = vmatprep.subr.mxu0 0.0
        %504 = vmatpush1.msra.mxu0 0.0
        %505 = vmatprep.subr.mxu0 0.0
        %506 = vmatpush1.msra.mxu0 0.0
        %507 = vmatprep.subr.mxu0 0.0
        %508 = vmatpush1.msra.mxu0 0.0
        %509 = vmatprep.subr.mxu0 0.0
        %510 = vmatpush1.msra.mxu0 0.0
        %511 = vmatprep.subr.mxu0 0.0
        %512 = vmatpush1.msra.mxu0 0.0
        %513 = vmatprep.mubr.f32.mxu0 0.0
        %514 = vmatmul.mubr.f32.gmra.mrb[0].mxu0 %v447
        %v515 = vpop.f32.mrb[0].mxu0
        %v516 = vadd.f32 0.0, %v515
        %v517 = vpop.f32.mrb[0].mxu0
        %518 = vdwg.mxu0
        %519 = vrot.lane.b32.xlu0 %v516, 1
        %v520 = vpop.permute.xlu0 %519
        %v521 = vmul.f32 %v520, %v436
        %v522 = vmul.f32 %v521, 0.25
        %v523 = vmul.f32 %v516, 0.5
        %v524 = vadd.f32 %v522, %v523
        %525 = vrot.lane.b32.xlu0 %v516, 127
        %v526 = vpop.permute.xlu0 %525
        %v527 = vmul.f32 %v526, %v443
        %v528 = vmul.f32 %v527, 0.25
        %v529 = vadd.f32 %v524, %v528
        %531 = vset.pattern.permute.xlu0 0
        %532 = vperm.xlu0 %531, %v422
        %v533 = vpop.permute.xlu0 %532
        %v535 = vadd.f32 %v529, %v533
        %536 = vset.pattern.permute.xlu0 1
        %537 = vperm.xlu0 %536, %v422
        %v538 = vpop.permute.xlu0 %537
        %v541 = vlaneseq
        %v542 = vshrl.u32 %v541, 7
        %v543 = vsub.s32 0, %v542
        %v544 = vrot.slane %v428, %v543
        %v546 = vmul.f32 %v538, %v544
        %v547 = vadd.f32 %v535, %v546
        %vm548 = vcmp.ge.f32.partialorder %v547, 0.0
        %v549 = vmul.f32 %v547, 0.2
        %v550 = vsel %vm548, %v547, %v549
        %551 = vmatprep.subr.mxu0 0.0
        %552 = vmatpush1.msra.mxu0 %v405
        %553 = vmatprep.subr.mxu0 0.0
        %554 = vmatpush1.msra.mxu0 %v406
        %555 = vmatprep.subr.mxu0 0.0
        %556 = vmatpush1.msra.mxu0 %v407
        %557 = vmatprep.subr.mxu0 0.0
        %558 = vmatpush1.msra.mxu0 %v408
        %559 = vmatprep.subr.mxu0 0.0
        %560 = vmatpush1.msra.mxu0 %v409
        %561 = vmatprep.subr.mxu0 0.0
        %562 = vmatpush1.msra.mxu0 %v410
        %563 = vmatprep.subr.mxu0 0.0
        %564 = vmatpush1.msra.mxu0 %v411
        %565 = vmatprep.subr.mxu0 0.0
        %566 = vmatpush1.msra.mxu0 %v412
        %567 = vmatprep.subr.mxu0 0.0
        %568 = vmatpush1.msra.mxu0 %v413
        %569 = vmatprep.subr.mxu0 0.0
        %570 = vmatpush1.msra.mxu0 %v414
        %571 = vmatprep.subr.mxu0 0.0
        %572 = vmatpush1.msra.mxu0 %v415
        %573 = vmatprep.subr.mxu0 0.0
        %574 = vmatpush1.msra.mxu0 %v416
        %575 = vmatprep.subr.mxu0 0.0
        %576 = vmatpush1.msra.mxu0 %v417
        %577 = vmatprep.subr.mxu0 0.0
        %578 = vmatpush1.msra.mxu0 %v418
        %579 = vmatprep.subr.mxu0 0.0
        %580 = vmatpush1.msra.mxu0 %v419
        %581 = vmatprep.subr.mxu0 0.0
        %582 = vmatpush1.msra.mxu0 %v420
        %583 = vmatprep.subr.mxu0 0.0
        %584 = vmatpush1.msra.mxu0 0.0
        %585 = vmatprep.subr.mxu0 0.0
        %586 = vmatpush1.msra.mxu0 0.0
        %587 = vmatprep.subr.mxu0 0.0
        %588 = vmatpush1.msra.mxu0 0.0
        %589 = vmatprep.subr.mxu0 0.0
        %590 = vmatpush1.msra.mxu0 0.0
        %591 = vmatprep.subr.mxu0 0.0
        %592 = vmatpush1.msra.mxu0 0.0
        %593 = vmatprep.subr.mxu0 0.0
        %594 = vmatpush1.msra.mxu0 0.0
        %595 = vmatprep.subr.mxu0 0.0
        %596 = vmatpush1.msra.mxu0 0.0
        %597 = vmatprep.subr.mxu0 0.0
        %598 = vmatpush1.msra.mxu0 0.0
        %599 = vmatprep.subr.mxu0 0.0
        %600 = vmatpush1.msra.mxu0 0.0
        %601 = vmatprep.subr.mxu0 0.0
        %602 = vmatpush1.msra.mxu0 0.0
        %603 = vmatprep.subr.mxu0 0.0
        %604 = vmatpush1.msra.mxu0 0.0
        %605 = vmatprep.subr.mxu0 0.0
        %606 = vmatpush1.msra.mxu0 0.0
        %607 = vmatprep.subr.mxu0 0.0
        %608 = vmatpush1.msra.mxu0 0.0
        %609 = vmatprep.subr.mxu0 0.0
        %610 = vmatpush1.msra.mxu0 0.0
        %611 = vmatprep.subr.mxu0 0.0
        %612 = vmatpush1.msra.mxu0 0.0
        %613 = vmatprep.subr.mxu0 0.0
        %614 = vmatpush1.msra.mxu0 0.0
        %615 = vmatprep.mubr.f32.mxu0 0.0
        %616 = vmatmul.mubr.f32.gmra.mrb[0].mxu0 %v550
        %v617 = vpop.f32.mrb[0].mxu0
        %v618 = vadd.f32 0.0, %v617
        %v619 = vpop.f32.mrb[0].mxu0
        %620 = vdwg.mxu0
        %v621 = vmul.f32 %v550, %v550
        %622 = vmatprep.subr.mxu0 0.0
        %623 = vmatpush1.msra.mxu0 %v405
        %624 = vmatprep.subr.mxu0 0.0
        %625 = vmatpush1.msra.mxu0 %v406
        %626 = vmatprep.subr.mxu0 0.0
        %627 = vmatpush1.msra.mxu0 %v407
        %628 = vmatprep.subr.mxu0 0.0
        %629 = vmatpush1.msra.mxu0 %v408
        %630 = vmatprep.subr.mxu0 0.0
        %631 = vmatpush1.msra.mxu0 %v409
        %632 = vmatprep.subr.mxu0 0.0
        %633 = vmatpush1.msra.mxu0 %v410
        %634 = vmatprep.subr.mxu0 0.0
        %635 = vmatpush1.msra.mxu0 %v411
        %636 = vmatprep.subr.mxu0 0.0
        %637 = vmatpush1.msra.mxu0 %v412
        %638 = vmatprep.subr.mxu0 0.0
        %639 = vmatpush1.msra.mxu0 %v413
        %640 = vmatprep.subr.mxu0 0.0
        %641 = vmatpush1.msra.mxu0 %v414
        %642 = vmatprep.subr.mxu0 0.0
        %643 = vmatpush1.msra.mxu0 %v415
        %644 = vmatprep.subr.mxu0 0.0
        %645 = vmatpush1.msra.mxu0 %v416
        %646 = vmatprep.subr.mxu0 0.0
        %647 = vmatpush1.msra.mxu0 %v417
        %648 = vmatprep.subr.mxu0 0.0
        %649 = vmatpush1.msra.mxu0 %v418
        %650 = vmatprep.subr.mxu0 0.0
        %651 = vmatpush1.msra.mxu0 %v419
        %652 = vmatprep.subr.mxu0 0.0
        %653 = vmatpush1.msra.mxu0 %v420
        %654 = vmatprep.subr.mxu0 0.0
        %655 = vmatpush1.msra.mxu0 0.0
        %656 = vmatprep.subr.mxu0 0.0
        %657 = vmatpush1.msra.mxu0 0.0
        %658 = vmatprep.subr.mxu0 0.0
        %659 = vmatpush1.msra.mxu0 0.0
        %660 = vmatprep.subr.mxu0 0.0
        %661 = vmatpush1.msra.mxu0 0.0
        %662 = vmatprep.subr.mxu0 0.0
        %663 = vmatpush1.msra.mxu0 0.0
        %664 = vmatprep.subr.mxu0 0.0
        %665 = vmatpush1.msra.mxu0 0.0
        %666 = vmatprep.subr.mxu0 0.0
        %667 = vmatpush1.msra.mxu0 0.0
        %668 = vmatprep.subr.mxu0 0.0
        %669 = vmatpush1.msra.mxu0 0.0
        %670 = vmatprep.subr.mxu0 0.0
        %671 = vmatpush1.msra.mxu0 0.0
        %672 = vmatprep.subr.mxu0 0.0
        %673 = vmatpush1.msra.mxu0 0.0
        %674 = vmatprep.subr.mxu0 0.0
        %675 = vmatpush1.msra.mxu0 0.0
        %676 = vmatprep.subr.mxu0 0.0
        %677 = vmatpush1.msra.mxu0 0.0
        %678 = vmatprep.subr.mxu0 0.0
        %679 = vmatpush1.msra.mxu0 0.0
        %680 = vmatprep.subr.mxu0 0.0
        %681 = vmatpush1.msra.mxu0 0.0
        %682 = vmatprep.subr.mxu0 0.0
        %683 = vmatpush1.msra.mxu0 0.0
        %684 = vmatprep.subr.mxu0 0.0
        %685 = vmatpush1.msra.mxu0 0.0
        %686 = vmatprep.mubr.f32.mxu0 0.0
        %687 = vmatmul.mubr.f32.gmra.mrb[0].mxu0 %v621
        %v688 = vpop.f32.mrb[0].mxu0
        %v689 = vadd.f32 0.0, %v688
        %v690 = vpop.f32.mrb[0].mxu0
        %691 = vdwg.mxu0
        %v692 = vmul.f32 %v618, %v618
        %v693 = vsub.f32 %v689, %v692
        %v694 = vadd.f32 %v693, 1e-05
        %v695 = vrsqrt.pop %v694
        %v696 = vmul.f32 %v695, %v423
        %v697 = vmul.f32 %v618, %v696
        %v698 = vsub.f32 %v424, %v697
        %vm699 = vcmask 31744
        %v701 = vsel %vm699, %v696, 0
        %vm703 = vcmask 1043456
        %v705 = vsel %vm703, %v421, 0
        %707 = vmatprep.subr.mxu0 0.0
        %708 = vmatpush1.msra.mxu0 %v705
        %709 = vmatprep.subr.mxu0 0.0
        %710 = vmatpush1.msra.mxu0 0.0
        %711 = vmatprep.subr.mxu0 0.0
        %712 = vmatpush1.msra.mxu0 0.0
        %713 = vmatprep.subr.mxu0 0.0
        %714 = vmatpush1.msra.mxu0 0.0
        %715 = vmatprep.subr.mxu0 0.0
        %716 = vmatpush1.msra.mxu0 0.0
        %717 = vmatprep.subr.mxu0 0.0
        %718 = vmatpush1.msra.mxu0 0.0
        %719 = vmatprep.subr.mxu0 0.0
        %720 = vmatpush1.msra.mxu0 0.0
        %721 = vmatprep.subr.mxu0 0.0
        %722 = vmatpush1.msra.mxu0 0.0
        %723 = vmatprep.subr.mxu0 0.0
        %724 = vmatpush1.msra.mxu0 0.0
        %725 = vmatprep.subr.mxu0 0.0
        %726 = vmatpush1.msra.mxu0 0.0
        %727 = vmatprep.subr.mxu0 0.0
        %728 = vmatpush1.msra.mxu0 0.0
        %729 = vmatprep.subr.mxu0 0.0
        %730 = vmatpush1.msra.mxu0 0.0
        %731 = vmatprep.subr.mxu0 0.0
        %732 = vmatpush1.msra.mxu0 0.0
        %733 = vmatprep.subr.mxu0 0.0
        %734 = vmatpush1.msra.mxu0 0.0
        %735 = vmatprep.subr.mxu0 0.0
        %736 = vmatpush1.msra.mxu0 0.0
        %737 = vmatprep.subr.mxu0 0.0
        %738 = vmatpush1.msra.mxu0 0.0
        %739 = vmatprep.subr.mxu0 0.0
        %740 = vmatpush1.msra.mxu0 0.0
        %741 = vmatprep.subr.mxu0 0.0
        %742 = vmatpush1.msra.mxu0 0.0
        %743 = vmatprep.subr.mxu0 0.0
        %744 = vmatpush1.msra.mxu0 0.0
        %745 = vmatprep.subr.mxu0 0.0
        %746 = vmatpush1.msra.mxu0 0.0
        %747 = vmatprep.subr.mxu0 0.0
        %748 = vmatpush1.msra.mxu0 0.0
        %749 = vmatprep.subr.mxu0 0.0
        %750 = vmatpush1.msra.mxu0 0.0
        %751 = vmatprep.subr.mxu0 0.0
        %752 = vmatpush1.msra.mxu0 0.0
        %753 = vmatprep.subr.mxu0 0.0
        %754 = vmatpush1.msra.mxu0 0.0
        %755 = vmatprep.subr.mxu0 0.0
        %756 = vmatpush1.msra.mxu0 0.0
        %757 = vmatprep.subr.mxu0 0.0
        %758 = vmatpush1.msra.mxu0 0.0
        %759 = vmatprep.subr.mxu0 0.0
        %760 = vmatpush1.msra.mxu0 0.0
        %761 = vmatprep.subr.mxu0 0.0
        %762 = vmatpush1.msra.mxu0 0.0
        %763 = vmatprep.subr.mxu0 0.0
        %764 = vmatpush1.msra.mxu0 0.0
        %765 = vmatprep.subr.mxu0 0.0
        %766 = vmatpush1.msra.mxu0 0.0
        %767 = vmatprep.subr.mxu0 0.0
        %768 = vmatpush1.msra.mxu0 0.0
        %769 = vmatprep.subr.mxu0 0.0
        %770 = vmatpush1.msra.mxu0 0.0
        %771 = vmatprep.mubr.f32.mxu0 0.0
        %772 = vmatmul.mubr.f32.gmra.mrb[0].mxu0 %v701
        %v773 = vpop.f32.mrb[0].mxu0
        %v774 = vadd.f32 0.0, %v773
        %v775 = vpop.f32.mrb[0].mxu0
        %776 = vdwg.mxu0
        %v777 = vmul.f32 %v550, %v774
        %v779 = vsel %vm699, %v698, 0
        %781 = vmatprep.subr.mxu0 0.0
        %782 = vmatpush1.msra.mxu0 %v705
        %783 = vmatprep.subr.mxu0 0.0
        %784 = vmatpush1.msra.mxu0 0.0
        %785 = vmatprep.subr.mxu0 0.0
        %786 = vmatpush1.msra.mxu0 0.0
        %787 = vmatprep.subr.mxu0 0.0
        %788 = vmatpush1.msra.mxu0 0.0
        %789 = vmatprep.subr.mxu0 0.0
        %790 = vmatpush1.msra.mxu0 0.0
        %791 = vmatprep.subr.mxu0 0.0
        %792 = vmatpush1.msra.mxu0 0.0
        %793 = vmatprep.subr.mxu0 0.0
        %794 = vmatpush1.msra.mxu0 0.0
        %795 = vmatprep.subr.mxu0 0.0
        %796 = vmatpush1.msra.mxu0 0.0
        %797 = vmatprep.subr.mxu0 0.0
        %798 = vmatpush1.msra.mxu0 0.0
        %799 = vmatprep.subr.mxu0 0.0
        %800 = vmatpush1.msra.mxu0 0.0
        %801 = vmatprep.subr.mxu0 0.0
        %802 = vmatpush1.msra.mxu0 0.0
        %803 = vmatprep.subr.mxu0 0.0
        %804 = vmatpush1.msra.mxu0 0.0
        %805 = vmatprep.subr.mxu0 0.0
        %806 = vmatpush1.msra.mxu0 0.0
        %807 = vmatprep.subr.mxu0 0.0
        %808 = vmatpush1.msra.mxu0 0.0
        %809 = vmatprep.subr.mxu0 0.0
        %810 = vmatpush1.msra.mxu0 0.0
        %811 = vmatprep.subr.mxu0 0.0
        %812 = vmatpush1.msra.mxu0 0.0
        %813 = vmatprep.subr.mxu0 0.0
        %814 = vmatpush1.msra.mxu0 0.0
        %815 = vmatprep.subr.mxu0 0.0
        %816 = vmatpush1.msra.mxu0 0.0
        %817 = vmatprep.subr.mxu0 0.0
        %818 = vmatpush1.msra.mxu0 0.0
        %819 = vmatprep.subr.mxu0 0.0
        %820 = vmatpush1.msra.mxu0 0.0
        %821 = vmatprep.subr.mxu0 0.0
        %822 = vmatpush1.msra.mxu0 0.0
        %823 = vmatprep.subr.mxu0 0.0
        %824 = vmatpush1.msra.mxu0 0.0
        %825 = vmatprep.subr.mxu0 0.0
        %826 = vmatpush1.msra.mxu0 0.0
        %827 = vmatprep.subr.mxu0 0.0
        %828 = vmatpush1.msra.mxu0 0.0
        %829 = vmatprep.subr.mxu0 0.0
        %830 = vmatpush1.msra.mxu0 0.0
        %831 = vmatprep.subr.mxu0 0.0
        %832 = vmatpush1.msra.mxu0 0.0
        %833 = vmatprep.subr.mxu0 0.0
        %834 = vmatpush1.msra.mxu0 0.0
        %835 = vmatprep.subr.mxu0 0.0
        %836 = vmatpush1.msra.mxu0 0.0
        %837 = vmatprep.subr.mxu0 0.0
        %838 = vmatpush1.msra.mxu0 0.0
        %839 = vmatprep.subr.mxu0 0.0
        %840 = vmatpush1.msra.mxu0 0.0
        %841 = vmatprep.subr.mxu0 0.0
        %842 = vmatpush1.msra.mxu0 0.0
        %843 = vmatprep.subr.mxu0 0.0
        %844 = vmatpush1.msra.mxu0 0.0
        %845 = vmatprep.mubr.f32.mxu0 0.0
        %846 = vmatmul.mubr.f32.gmra.mrb[0].mxu0 %v779
        %v847 = vpop.f32.mrb[0].mxu0
        %v848 = vadd.f32 0.0, %v847
        %v849 = vpop.f32.mrb[0].mxu0
        %850 = vdwg.mxu0
        %v851 = vadd.f32 %v777, %v848
        %v852 = vld [vmem:[%s2] sm:$0xff]
        %853 = vrot.lane.b32.xlu0 %v851, 1
        %v854 = vpop.permute.xlu0 %853
        %v855 = vmul.f32 %v854, %v436
        %856 = vrot.lane.b32.xlu0 %v851, 127
        %v857 = vpop.permute.xlu0 %856
        %v858 = vmul.f32 %v857, %v443
        %859 = vset.pattern.permute.xlu0 2
        %860 = vperm.xlu0 %859, %v422
        %v861 = vpop.permute.xlu0 %860
        %v864 = vsel %vm445, %v852, 0
        %866 = vmatprep.subr.mxu0 0.0
        %867 = vmatpush1.msra.mxu0 %v855
        %868 = vmatprep.subr.mxu0 0.0
        %869 = vmatpush1.msra.mxu0 %v851
        %870 = vmatprep.subr.mxu0 0.0
        %871 = vmatpush1.msra.mxu0 %v858
        %872 = vmatprep.subr.mxu0 0.0
        %873 = vmatpush1.msra.mxu0 0.0
        %874 = vmatprep.subr.mxu0 0.0
        %875 = vmatpush1.msra.mxu0 0.0
        %876 = vmatprep.subr.mxu0 0.0
        %877 = vmatpush1.msra.mxu0 0.0
        %878 = vmatprep.subr.mxu0 0.0
        %879 = vmatpush1.msra.mxu0 0.0
        %880 = vmatprep.subr.mxu0 0.0
        %881 = vmatpush1.msra.mxu0 0.0
        %882 = vmatprep.subr.mxu0 0.0
        %883 = vmatpush1.msra.mxu0 0.0
        %884 = vmatprep.subr.mxu0 0.0
        %885 = vmatpush1.msra.mxu0 0.0
        %886 = vmatprep.subr.mxu0 0.0
        %887 = vmatpush1.msra.mxu0 0.0
        %888 = vmatprep.subr.mxu0 0.0
        %889 = vmatpush1.msra.mxu0 0.0
        %890 = vmatprep.subr.mxu0 0.0
        %891 = vmatpush1.msra.mxu0 0.0
        %892 = vmatprep.subr.mxu0 0.0
        %893 = vmatpush1.msra.mxu0 0.0
        %894 = vmatprep.subr.mxu0 0.0
        %895 = vmatpush1.msra.mxu0 0.0
        %896 = vmatprep.subr.mxu0 0.0
        %897 = vmatpush1.msra.mxu0 0.0
        %898 = vmatprep.subr.mxu0 0.0
        %899 = vmatpush1.msra.mxu0 0.0
        %900 = vmatprep.subr.mxu0 0.0
        %901 = vmatpush1.msra.mxu0 0.0
        %902 = vmatprep.subr.mxu0 0.0
        %903 = vmatpush1.msra.mxu0 0.0
        %904 = vmatprep.subr.mxu0 0.0
        %905 = vmatpush1.msra.mxu0 0.0
        %906 = vmatprep.subr.mxu0 0.0
        %907 = vmatpush1.msra.mxu0 0.0
        %908 = vmatprep.subr.mxu0 0.0
        %909 = vmatpush1.msra.mxu0 0.0
        %910 = vmatprep.subr.mxu0 0.0
        %911 = vmatpush1.msra.mxu0 0.0
        %912 = vmatprep.subr.mxu0 0.0
        %913 = vmatpush1.msra.mxu0 0.0
        %914 = vmatprep.subr.mxu0 0.0
        %915 = vmatpush1.msra.mxu0 0.0
        %916 = vmatprep.subr.mxu0 0.0
        %917 = vmatpush1.msra.mxu0 0.0
        %918 = vmatprep.subr.mxu0 0.0
        %919 = vmatpush1.msra.mxu0 0.0
        %920 = vmatprep.subr.mxu0 0.0
        %921 = vmatpush1.msra.mxu0 0.0
        %922 = vmatprep.subr.mxu0 0.0
        %923 = vmatpush1.msra.mxu0 0.0
        %924 = vmatprep.subr.mxu0 0.0
        %925 = vmatpush1.msra.mxu0 0.0
        %926 = vmatprep.subr.mxu0 0.0
        %927 = vmatpush1.msra.mxu0 0.0
        %928 = vmatprep.subr.mxu0 0.0
        %929 = vmatpush1.msra.mxu0 0.0
        %930 = vmatprep.mubr.f32.mxu0 0.0
        %931 = vmatmul.mubr.f32.gmra.mrb[0].mxu0 %v864
        %v932 = vpop.f32.mrb[0].mxu0
        %v933 = vadd.f32 %v861, %v932
        %v934 = vpop.f32.mrb[0].mxu0
        %935 = vdwg.mxu0
        %936 = vset.pattern.permute.xlu0 3
        %937 = vperm.xlu0 %936, %v422
        %v938 = vpop.permute.xlu0 %937
        %v941 = vlaneseq
        %v942 = vshrl.u32 %v941, 7
        %v943 = vsub.s32 0, %v942
        %v944 = vrot.slane %v429, %v943
        %v946 = vmul.f32 %v938, %v944
        %v947 = vadd.f32 %v933, %v946
        %vm948 = vcmp.ge.f32.partialorder %v947, 0.0
        %v949 = vmul.f32 %v947, 0.2
        %v950 = vsel %vm948, %v947, %v949
        %951 = vmatprep.subr.mxu0 0.0
        %952 = vmatpush1.msra.mxu0 %v405
        %953 = vmatprep.subr.mxu0 0.0
        %954 = vmatpush1.msra.mxu0 %v406
        %955 = vmatprep.subr.mxu0 0.0
        %956 = vmatpush1.msra.mxu0 %v407
        %957 = vmatprep.subr.mxu0 0.0
        %958 = vmatpush1.msra.mxu0 %v408
        %959 = vmatprep.subr.mxu0 0.0
        %960 = vmatpush1.msra.mxu0 %v409
        %961 = vmatprep.subr.mxu0 0.0
        %962 = vmatpush1.msra.mxu0 %v410
        %963 = vmatprep.subr.mxu0 0.0
        %964 = vmatpush1.msra.mxu0 %v411
        %965 = vmatprep.subr.mxu0 0.0
        %966 = vmatpush1.msra.mxu0 %v412
        %967 = vmatprep.subr.mxu0 0.0
        %968 = vmatpush1.msra.mxu0 %v413
        %969 = vmatprep.subr.mxu0 0.0
        %970 = vmatpush1.msra.mxu0 %v414
        %971 = vmatprep.subr.mxu0 0.0
        %972 = vmatpush1.msra.mxu0 %v415
        %973 = vmatprep.subr.mxu0 0.0
        %974 = vmatpush1.msra.mxu0 %v416
        %975 = vmatprep.subr.mxu0 0.0
        %976 = vmatpush1.msra.mxu0 %v417
        %977 = vmatprep.subr.mxu0 0.0
        %978 = vmatpush1.msra.mxu0 %v418
        %979 = vmatprep.subr.mxu0 0.0
        %980 = vmatpush1.msra.mxu0 %v419
        %981 = vmatprep.subr.mxu0 0.0
        %982 = vmatpush1.msra.mxu0 %v420
        %983 = vmatprep.subr.mxu0 0.0
        %984 = vmatpush1.msra.mxu0 0.0
        %985 = vmatprep.subr.mxu0 0.0
        %986 = vmatpush1.msra.mxu0 0.0
        %987 = vmatprep.subr.mxu0 0.0
        %988 = vmatpush1.msra.mxu0 0.0
        %989 = vmatprep.subr.mxu0 0.0
        %990 = vmatpush1.msra.mxu0 0.0
        %991 = vmatprep.subr.mxu0 0.0
        %992 = vmatpush1.msra.mxu0 0.0
        %993 = vmatprep.subr.mxu0 0.0
        %994 = vmatpush1.msra.mxu0 0.0
        %995 = vmatprep.subr.mxu0 0.0
        %996 = vmatpush1.msra.mxu0 0.0
        %997 = vmatprep.subr.mxu0 0.0
        %998 = vmatpush1.msra.mxu0 0.0
        %999 = vmatprep.subr.mxu0 0.0
        %1000 = vmatpush1.msra.mxu0 0.0
        %1001 = vmatprep.subr.mxu0 0.0
        %1002 = vmatpush1.msra.mxu0 0.0
        %1003 = vmatprep.subr.mxu0 0.0
        %1004 = vmatpush1.msra.mxu0 0.0
        %1005 = vmatprep.subr.mxu0 0.0
        %1006 = vmatpush1.msra.mxu0 0.0
        %1007 = vmatprep.subr.mxu0 0.0
        %1008 = vmatpush1.msra.mxu0 0.0
        %1009 = vmatprep.subr.mxu0 0.0
        %1010 = vmatpush1.msra.mxu0 0.0
        %1011 = vmatprep.subr.mxu0 0.0
        %1012 = vmatpush1.msra.mxu0 0.0
        %1013 = vmatprep.subr.mxu0 0.0
        %1014 = vmatpush1.msra.mxu0 0.0
        %1015 = vmatprep.mubr.f32.mxu0 0.0
        %1016 = vmatmul.mubr.f32.gmra.mrb[0].mxu0 %v950
        %v1017 = vpop.f32.mrb[0].mxu0
        %v1018 = vadd.f32 0.0, %v1017
        %v1019 = vpop.f32.mrb[0].mxu0
        %1020 = vdwg.mxu0
        %v1021 = vmul.f32 %v950, %v950
        %1022 = vmatprep.subr.mxu0 0.0
        %1023 = vmatpush1.msra.mxu0 %v405
        %1024 = vmatprep.subr.mxu0 0.0
        %1025 = vmatpush1.msra.mxu0 %v406
        %1026 = vmatprep.subr.mxu0 0.0
        %1027 = vmatpush1.msra.mxu0 %v407
        %1028 = vmatprep.subr.mxu0 0.0
        %1029 = vmatpush1.msra.mxu0 %v408
        %1030 = vmatprep.subr.mxu0 0.0
        %1031 = vmatpush1.msra.mxu0 %v409
        %1032 = vmatprep.subr.mxu0 0.0
        %1033 = vmatpush1.msra.mxu0 %v410
        %1034 = vmatprep.subr.mxu0 0.0
        %1035 = vmatpush1.msra.mxu0 %v411
        %1036 = vmatprep.subr.mxu0 0.0
        %1037 = vmatpush1.msra.mxu0 %v412
        %1038 = vmatprep.subr.mxu0 0.0
        %1039 = vmatpush1.msra.mxu0 %v413
        %1040 = vmatprep.subr.mxu0 0.0
        %1041 = vmatpush1.msra.mxu0 %v414
        %1042 = vmatprep.subr.mxu0 0.0
        %1043 = vmatpush1.msra.mxu0 %v415
        %1044 = vmatprep.subr.mxu0 0.0
        %1045 = vmatpush1.msra.mxu0 %v416
        %1046 = vmatprep.subr.mxu0 0.0
        %1047 = vmatpush1.msra.mxu0 %v417
        %1048 = vmatprep.subr.mxu0 0.0
        %1049 = vmatpush1.msra.mxu0 %v418
        %1050 = vmatprep.subr.mxu0 0.0
        %1051 = vmatpush1.msra.mxu0 %v419
        %1052 = vmatprep.subr.mxu0 0.0
        %1053 = vmatpush1.msra.mxu0 %v420
        %1054 = vmatprep.subr.mxu0 0.0
        %1055 = vmatpush1.msra.mxu0 0.0
        %1056 = vmatprep.subr.mxu0 0.0
        %1057 = vmatpush1.msra.mxu0 0.0
        %1058 = vmatprep.subr.mxu0 0.0
        %1059 = vmatpush1.msra.mxu0 0.0
        %1060 = vmatprep.subr.mxu0 0.0
        %1061 = vmatpush1.msra.mxu0 0.0
        %1062 = vmatprep.subr.mxu0 0.0
        %1063 = vmatpush1.msra.mxu0 0.0
        %1064 = vmatprep.subr.mxu0 0.0
        %1065 = vmatpush1.msra.mxu0 0.0
        %1066 = vmatprep.subr.mxu0 0.0
        %1067 = vmatpush1.msra.mxu0 0.0
        %1068 = vmatprep.subr.mxu0 0.0
        %1069 = vmatpush1.msra.mxu0 0.0
        %1070 = vmatprep.subr.mxu0 0.0
        %1071 = vmatpush1.msra.mxu0 0.0
        %1072 = vmatprep.subr.mxu0 0.0
        %1073 = vmatpush1.msra.mxu0 0.0
        %1074 = vmatprep.subr.mxu0 0.0
        %1075 = vmatpush1.msra.mxu0 0.0
        %1076 = vmatprep.subr.mxu0 0.0
        %1077 = vmatpush1.msra.mxu0 0.0
        %1078 = vmatprep.subr.mxu0 0.0
        %1079 = vmatpush1.msra.mxu0 0.0
        %1080 = vmatprep.subr.mxu0 0.0
        %1081 = vmatpush1.msra.mxu0 0.0
        %1082 = vmatprep.subr.mxu0 0.0
        %1083 = vmatpush1.msra.mxu0 0.0
        %1084 = vmatprep.subr.mxu0 0.0
        %1085 = vmatpush1.msra.mxu0 0.0
        %1086 = vmatprep.mubr.f32.mxu0 0.0
        %1087 = vmatmul.mubr.f32.gmra.mrb[0].mxu0 %v1021
        %v1088 = vpop.f32.mrb[0].mxu0
        %v1089 = vadd.f32 0.0, %v1088
        %v1090 = vpop.f32.mrb[0].mxu0
        %1091 = vdwg.mxu0
        %v1092 = vmul.f32 %v1018, %v1018
        %v1093 = vsub.f32 %v1089, %v1092
        %v1094 = vadd.f32 %v1093, 1e-05
        %v1095 = vrsqrt.pop %v1094
        %v1096 = vmul.f32 %v1095, %v425
        %v1097 = vmul.f32 %v1018, %v1096
        %v1098 = vsub.f32 %v426, %v1097
        %v1100 = vsel %vm699, %v1096, 0
        %1102 = vmatprep.subr.mxu0 0.0
        %1103 = vmatpush1.msra.mxu0 %v705
        %1104 = vmatprep.subr.mxu0 0.0
        %1105 = vmatpush1.msra.mxu0 0.0
        %1106 = vmatprep.subr.mxu0 0.0
        %1107 = vmatpush1.msra.mxu0 0.0
        %1108 = vmatprep.subr.mxu0 0.0
        %1109 = vmatpush1.msra.mxu0 0.0
        %1110 = vmatprep.subr.mxu0 0.0
        %1111 = vmatpush1.msra.mxu0 0.0
        %1112 = vmatprep.subr.mxu0 0.0
        %1113 = vmatpush1.msra.mxu0 0.0
        %1114 = vmatprep.subr.mxu0 0.0
        %1115 = vmatpush1.msra.mxu0 0.0
        %1116 = vmatprep.subr.mxu0 0.0
        %1117 = vmatpush1.msra.mxu0 0.0
        %1118 = vmatprep.subr.mxu0 0.0
        %1119 = vmatpush1.msra.mxu0 0.0
        %1120 = vmatprep.subr.mxu0 0.0
        %1121 = vmatpush1.msra.mxu0 0.0
        %1122 = vmatprep.subr.mxu0 0.0
        %1123 = vmatpush1.msra.mxu0 0.0
        %1124 = vmatprep.subr.mxu0 0.0
        %1125 = vmatpush1.msra.mxu0 0.0
        %1126 = vmatprep.subr.mxu0 0.0
        %1127 = vmatpush1.msra.mxu0 0.0
        %1128 = vmatprep.subr.mxu0 0.0
        %1129 = vmatpush1.msra.mxu0 0.0
        %1130 = vmatprep.subr.mxu0 0.0
        %1131 = vmatpush1.msra.mxu0 0.0
        %1132 = vmatprep.subr.mxu0 0.0
        %1133 = vmatpush1.msra.mxu0 0.0
        %1134 = vmatprep.subr.mxu0 0.0
        %1135 = vmatpush1.msra.mxu0 0.0
        %1136 = vmatprep.subr.mxu0 0.0
        %1137 = vmatpush1.msra.mxu0 0.0
        %1138 = vmatprep.subr.mxu0 0.0
        %1139 = vmatpush1.msra.mxu0 0.0
        %1140 = vmatprep.subr.mxu0 0.0
        %1141 = vmatpush1.msra.mxu0 0.0
        %1142 = vmatprep.subr.mxu0 0.0
        %1143 = vmatpush1.msra.mxu0 0.0
        %1144 = vmatprep.subr.mxu0 0.0
        %1145 = vmatpush1.msra.mxu0 0.0
        %1146 = vmatprep.subr.mxu0 0.0
        %1147 = vmatpush1.msra.mxu0 0.0
        %1148 = vmatprep.subr.mxu0 0.0
        %1149 = vmatpush1.msra.mxu0 0.0
        %1150 = vmatprep.subr.mxu0 0.0
        %1151 = vmatpush1.msra.mxu0 0.0
        %1152 = vmatprep.subr.mxu0 0.0
        %1153 = vmatpush1.msra.mxu0 0.0
        %1154 = vmatprep.subr.mxu0 0.0
        %1155 = vmatpush1.msra.mxu0 0.0
        %1156 = vmatprep.subr.mxu0 0.0
        %1157 = vmatpush1.msra.mxu0 0.0
        %1158 = vmatprep.subr.mxu0 0.0
        %1159 = vmatpush1.msra.mxu0 0.0
        %1160 = vmatprep.subr.mxu0 0.0
        %1161 = vmatpush1.msra.mxu0 0.0
        %1162 = vmatprep.subr.mxu0 0.0
        %1163 = vmatpush1.msra.mxu0 0.0
        %1164 = vmatprep.subr.mxu0 0.0
        %1165 = vmatpush1.msra.mxu0 0.0
        %1166 = vmatprep.mubr.f32.mxu0 0.0
        %1167 = vmatmul.mubr.f32.gmra.mrb[0].mxu0 %v1100
        %v1168 = vpop.f32.mrb[0].mxu0
        %v1169 = vadd.f32 0.0, %v1168
        %v1170 = vpop.f32.mrb[0].mxu0
        %1171 = vdwg.mxu0
        %v1172 = vmul.f32 %v950, %v1169
        %v1174 = vsel %vm699, %v1098, 0
        %1176 = vmatprep.subr.mxu0 0.0
        %1177 = vmatpush1.msra.mxu0 %v705
        %1178 = vmatprep.subr.mxu0 0.0
        %1179 = vmatpush1.msra.mxu0 0.0
        %1180 = vmatprep.subr.mxu0 0.0
        %1181 = vmatpush1.msra.mxu0 0.0
        %1182 = vmatprep.subr.mxu0 0.0
        %1183 = vmatpush1.msra.mxu0 0.0
        %1184 = vmatprep.subr.mxu0 0.0
        %1185 = vmatpush1.msra.mxu0 0.0
        %1186 = vmatprep.subr.mxu0 0.0
        %1187 = vmatpush1.msra.mxu0 0.0
        %1188 = vmatprep.subr.mxu0 0.0
        %1189 = vmatpush1.msra.mxu0 0.0
        %1190 = vmatprep.subr.mxu0 0.0
        %1191 = vmatpush1.msra.mxu0 0.0
        %1192 = vmatprep.subr.mxu0 0.0
        %1193 = vmatpush1.msra.mxu0 0.0
        %1194 = vmatprep.subr.mxu0 0.0
        %1195 = vmatpush1.msra.mxu0 0.0
        %1196 = vmatprep.subr.mxu0 0.0
        %1197 = vmatpush1.msra.mxu0 0.0
        %1198 = vmatprep.subr.mxu0 0.0
        %1199 = vmatpush1.msra.mxu0 0.0
        %1200 = vmatprep.subr.mxu0 0.0
        %1201 = vmatpush1.msra.mxu0 0.0
        %1202 = vmatprep.subr.mxu0 0.0
        %1203 = vmatpush1.msra.mxu0 0.0
        %1204 = vmatprep.subr.mxu0 0.0
        %1205 = vmatpush1.msra.mxu0 0.0
        %1206 = vmatprep.subr.mxu0 0.0
        %1207 = vmatpush1.msra.mxu0 0.0
        %1208 = vmatprep.subr.mxu0 0.0
        %1209 = vmatpush1.msra.mxu0 0.0
        %1210 = vmatprep.subr.mxu0 0.0
        %1211 = vmatpush1.msra.mxu0 0.0
        %1212 = vmatprep.subr.mxu0 0.0
        %1213 = vmatpush1.msra.mxu0 0.0
        %1214 = vmatprep.subr.mxu0 0.0
        %1215 = vmatpush1.msra.mxu0 0.0
        %1216 = vmatprep.subr.mxu0 0.0
        %1217 = vmatpush1.msra.mxu0 0.0
        %1218 = vmatprep.subr.mxu0 0.0
        %1219 = vmatpush1.msra.mxu0 0.0
        %1220 = vmatprep.subr.mxu0 0.0
        %1221 = vmatpush1.msra.mxu0 0.0
        %1222 = vmatprep.subr.mxu0 0.0
        %1223 = vmatpush1.msra.mxu0 0.0
        %1224 = vmatprep.subr.mxu0 0.0
        %1225 = vmatpush1.msra.mxu0 0.0
        %1226 = vmatprep.subr.mxu0 0.0
        %1227 = vmatpush1.msra.mxu0 0.0
        %1228 = vmatprep.subr.mxu0 0.0
        %1229 = vmatpush1.msra.mxu0 0.0
        %1230 = vmatprep.subr.mxu0 0.0
        %1231 = vmatpush1.msra.mxu0 0.0
        %1232 = vmatprep.subr.mxu0 0.0
        %1233 = vmatpush1.msra.mxu0 0.0
        %1234 = vmatprep.subr.mxu0 0.0
        %1235 = vmatpush1.msra.mxu0 0.0
        %1236 = vmatprep.subr.mxu0 0.0
        %1237 = vmatpush1.msra.mxu0 0.0
        %1238 = vmatprep.subr.mxu0 0.0
        %1239 = vmatpush1.msra.mxu0 0.0
        %1240 = vmatprep.mubr.f32.mxu0 0.0
        %1241 = vmatmul.mubr.f32.gmra.mrb[0].mxu0 %v1174
        %v1242 = vpop.f32.mrb[0].mxu0
        %v1243 = vadd.f32 0.0, %v1242
        %v1244 = vpop.f32.mrb[0].mxu0
        %1245 = vdwg.mxu0
        %v1246 = vadd.f32 %v1172, %v1243
        %1247 = vst [vmem:[%s387] sm:$0xff] %v1246
        %s1248 = sand.u32 %s262, 1
        %s1249 = scalar_lea.sflag [#allocation3], %s1248
        %s1250 = sand.u32 %s262, 1
        %s1251 = smul.addr %s1250, 8
        %s1252 = scalar_lea.vmem [#allocation2], %s1251
        // Predicated region
        $region61: #{tpu_custom_call.1} parent=59 // pred_check
          %p1253 = pneg %p272
        $region62: #{tpu_custom_call.1} parent=59 // pred_check_branch
          %1255 = sbr.rel (%p1253) target = $region64
        $region63: #{tpu_custom_call.1} parent=59 // pred_region
          %s1257 = ssub.s32 128, 128
          %1258 = vsyncadd %s1249, %s1257
          %s1259 = smul.addr %s24, 128
          %s1260 = scalar_lea.hbm %s10, %s1259
          %s1262 = sshll.u32 %s1252, 4
          %s1263 = int_to_ptr.vmem [resolvable:$true] %s1262
          %1265 = dma.vmem_to_hbm [thread:$0]  %s1263, 128, %s1260, %s1249
        $region64: #{tpu_custom_call.1} parent=59 // pred_fallthru
          _
      $region60: #{tpu_custom_call.1} parent=5 // pred_fallthru
        _
      %p1266 = scmp.le.s32.totalorder 2, %s19
      // Predicated region
      $region65: #{tpu_custom_call.1} parent=5 // pred_check
        %p1267 = pneg %p1266
      $region66: #{tpu_custom_call.1} parent=5 // pred_check_branch
        %1269 = sbr.rel (%p1267) target = $region68
      $region67: #{tpu_custom_call.1} parent=5 // pred_region
        %s1270 = ssub.s32 %s19, 2
        // Predicated region
        $region69: #{tpu_custom_call.1} parent=67 // pred_check
          %p1271 = pneg %p278
        $region70: #{tpu_custom_call.1} parent=67 // pred_check_branch
          %1273 = sbr.rel (%p1271) target = $region72
        $region71: #{tpu_custom_call.1} parent=67 // pred_region
          %s1274 = sand.u32 %s263, 1
          %s1275 = scalar_lea.sflag [#allocation3], %s1274
          %s1276 = sand.u32 %s263, 1
          %s1277 = smul.addr %s1276, 8
          %s1278 = scalar_lea.vmem [#allocation2], %s1277
          %1279 = dma.done %s1275, 128
        $region72: #{tpu_custom_call.1} parent=67 // pred_fallthru
          _
      $region68: #{tpu_custom_call.1} parent=5 // pred_fallthru
        _
    $region6: #{tpu_custom_call.1} parent=1 // loop_footer
      %s23 = sadd.s32 1, %s19
    $region7: #{tpu_custom_call.1} parent=1 // loop_footer_branch
      %18 = sbr.rel target = $region3
    $region8: #{tpu_custom_call.1} parent=1 // loop_exit
      _
    %1280 = vsyncpa [#allocation3], 1
    %s1281 = scalar_lea.sflag [#allocation3], 1
    %1282 = vsyncpa %s1281, 1

</llo_original>
